<compile_context>
chip_gen: v7x
topology: tpu7x:2x2x1
jax: 0.10.0
libtpu: 0.0.40
codegen_flags: <defaults>
</compile_context>

<pallas_src>
import jax
import jax.numpy as jnp
from jax.experimental import pallas as pl
from jax.experimental.pallas import tpu as pltpu


def _round_up(n, m):
    return ((n + m - 1) // m) * m


def _elu(x):
    # F.elu with alpha=1.0 : x for x>0, exp(x)-1 for x<=0
    return jnp.where(x > 0, x, jnp.exp(jnp.minimum(x, 0.0)) - 1.0)


def _device_kind():
    try:
        return jax.devices()[0].device_kind.lower()
    except Exception:
        return ""


def _num_tensorcores_per_device():
    kind = _device_kind()
    # Megacore chips (2 TensorCores behind one device): v4 / v5p / v7x.
    if ("v7" in kind) or ("v4" in kind) or ("v5p" in kind):
        return 2
    return 1  # v5e / v6e / unknown -> single TensorCore


def _has_bf16_vpu():
    kind = _device_kind()
    return ("v6" in kind) or ("v7" in kind)


def _pick_tile_b(B, num_cores):
    """Batch-tile size.

    Single-TC chips: one big tile (fewest grid steps).  Megacore chips: >= num_cores
    tiles so the 'parallel' batch axis is actually sharded across TensorCores.
    Only divisors of B are picked so the last tile never runs on padded rows.
    """
    if B % 8 != 0:
        return B  # block must equal the full dim if not sublane-aligned (perf cliff, but correct)
    if num_cores <= 1:
        for t in (1024, 512, 256, 128, 64, 32, 16, 8):
            if t <= B and B % t == 0:
                return t
        return B
    for t in (256, 128, 64, 32, 16, 8):
        if t * num_cores <= B and B % t == 0:
            return t
    return B


def pack_params(params, n1, n2, n3, latent):
    """Fuse fc21/fc22, cast weights to bf16 and pack all six into ONE resident block
    (row offsets 16-aligned so bf16 sublane tiles stay aligned), and pack all biases
    into one (8, maxw) f32 block."""
    bf16 = jnp.bfloat16
    w2 = jnp.concatenate([params["w21"], params["w22"]], axis=1)  # (n3, 2*latent)
    weights = [params["w1"], params["w11"], w2,
               params["w3"], params["w33"], params["w4"]]

    maxw = max(n1, n2, n3, 2 * latent)
    row_offs, off = [], 0
    for w in weights:
        row_offs.append(off)
        off += _round_up(w.shape[0], 16)
    total_rows = _round_up(off, 16)

    wpack = jnp.zeros((total_rows, maxw), bf16)
    for w, ro in zip(weights, row_offs):
        wpack = wpack.at[ro:ro + w.shape[0], :w.shape[1]].set(w.astype(bf16))

    bias_rows = [
        params["b1"].reshape(-1),
        params["b11"].reshape(-1),
        jnp.concatenate([params["b21"].reshape(-1), params["b22"].reshape(-1)]),
        params["b3"].reshape(-1),
        params["b33"].reshape(-1),
        params["b4"].reshape(-1),
    ]
    bias = jnp.zeros((8, maxw), jnp.float32)
    for r, v in enumerate(bias_rows):
        bias = bias.at[r, : v.shape[0]].set(v)

    return {
        "w": wpack,                 # (total_rows, maxw) bf16, all six weights
        "bias": bias,               # (8, maxw) f32, one bias per sublane row
        "row_offs": tuple(row_offs),
        "dims": (n1, n2, n3, latent),
    }


def _make_kernel(dims, row_offs, act_dtype, out_w):
    n1, n2, n3, latent = dims
    ro1, ro11, ro2, ro3, ro33, ro4 = row_offs

    def kernel(x_ref, eps_ref, w_ref, b_ref, out_ref):
        x = x_ref[...]          # bf16 (tile_b, n1)
        eps = eps_ref[...]      # f32  (tile_b, latent)
        b = b_ref[...]          # f32  (8, maxw) packed biases

        # static bias slices (sublane row + lane prefix)
        b1 = b[0:1, :n2]
        b11 = b[1:2, :n3]
        b2 = b[2:3, :2 * latent]
        b3 = b[3:4, :n3]
        b33 = b[4:5, :n2]
        b4 = b[5:6, :n1]

        # static (16-aligned) slices of the single packed bf16 weight block
        w1 = w_ref[ro1:ro1 + n1, :n2]
        w11 = w_ref[ro11:ro11 + n2, :n3]
        w2 = w_ref[ro2:ro2 + n3, :2 * latent]
        w3 = w_ref[ro3:ro3 + latent, :n3]
        w33 = w_ref[ro33:ro33 + n3, :n2]
        w4 = w_ref[ro4:ro4 + n2, :n1]

        def mm(a, w):
            # bf16 x bf16 MXU matmul, f32 accumulation
            return jnp.dot(a.astype(jnp.bfloat16), w,
                           preferred_element_type=jnp.float32)

        # ---- encode ----
        h11 = jnp.maximum((mm(x, w1) + b1).astype(act_dtype), 0.0)
        h1 = jnp.maximum((mm(h11, w11) + b11).astype(act_dtype), 0.0)
        mulv = mm(h1, w2) + b2                      # (tile_b, 2*latent) = [mu | logvar], f32
        mu = mulv[:, :latent]
        logvar = mulv[:, latent:]

        # ---- reparametrize (f32): z = eps * exp(0.5*logvar) + mu ----
        z = eps * jnp.exp(0.5 * logvar) + mu

        # ---- decode ----
        h33 = _elu((mm(z, w3) + b3).astype(act_dtype))
        h3 = _elu((mm(h33, w33) + b33).astype(act_dtype))
        logits = mm(h3, w4) + b4                    # f32
        # sigmoid: exp on the EUP, denominator reciprocal via approx vrcp (EUP slot)
        recon = pl.reciprocal(1.0 + jnp.exp(-logits), approx=True)

        # single lane-dense output slab: [recon | mu | logvar | pad]
        parts = [recon, mulv]
        pad = out_w - (n1 + 2 * latent)
        if pad > 0:
            parts.append(jnp.zeros((recon.shape[0], pad), jnp.float32))
        out_ref[...] = jnp.concatenate(parts, axis=-1).astype(out_ref.dtype)

    return kernel


def vae_forward(x, packed, eps):
    """x: (B, n1) f32/bf16, packed: output of pack_params, eps: (B, latent) f32."""
    B, n1 = x.shape
    n1_, n2, n3, latent = packed["dims"]
    assert n1 == n1_ and eps.shape == (B, latent)
    maxw = packed["bias"].shape[1]
    wrows = packed["w"].shape[0]

    num_cores = _num_tensorcores_per_device()
    act_dtype = jnp.bfloat16 if _has_bf16_vpu() else jnp.float32  # v5e: f32 VPU path
    tile_b = _pick_tile_b(B, num_cores)
    out_w = _round_up(n1 + 2 * latent, 128)         # lane-dense merged output width

    kernel = _make_kernel((n1, n2, n3, latent), packed["row_offs"], act_dtype, out_w)
    x_bf = x.astype(jnp.bfloat16)
    grid = (pl.cdiv(B, tile_b),)

    mm_flops = n1 * n2 + n2 * n3 + n3 * 2 * latent + latent * n3 + n3 * n2 + n2 * n1
    flops = 2 * B * mm_flops
    transcendentals = B * (latent + n3 + n2 + 2 * n1)
    bytes_accessed = (
        B * n1 * 2 + B * latent * 4                      # x (bf16) + eps (f32)
        + packed["w"].size * 2 + packed["bias"].size * 4  # packed weights + biases
        + B * out_w * 4                                  # merged output slab
    )

    # Rough VMEM need: resident blocks (default double-buffered) + 2x pipelined tiles.
    vmem_needed = (2 * (packed["w"].size * 2 + packed["bias"].size * 4)
                   + 2 * tile_b * (n1 * 2 + latent * 4 + out_w * 4))
    vmem_limit = None
    if vmem_needed > (24 << 20):
        # Scaled-up variant (e.g. n1=784, wide hidden): raise scoped VMEM explicitly,
        # staying well under v7x's 64 MiB physical VMEM.
        vmem_limit = min(int(1.5 * vmem_needed), 56 << 20)

    out = pl.pallas_call(
        kernel,
        out_shape=jax.ShapeDtypeStruct((B, out_w), jnp.float32),
        grid=grid,
        in_specs=[
            pl.BlockSpec((tile_b, n1), lambda i: (i, 0)),       # x (batch-tiled)
            pl.BlockSpec((tile_b, latent), lambda i: (i, 0)),   # eps (batch-tiled)
            pl.BlockSpec((wrows, maxw), lambda i: (0, 0)),      # packed weights (resident)
            pl.BlockSpec((8, maxw), lambda i: (0, 0)),          # packed biases (resident)
        ],
        out_specs=pl.BlockSpec((tile_b, out_w), lambda i: (i, 0)),
        compiler_params=pltpu.CompilerParams(
            dimension_semantics=("parallel",),
            vmem_limit_bytes=vmem_limit),
        cost_estimate=pl.CostEstimate(
            flops=flops,
            transcendentals=transcendentals,
            bytes_accessed=bytes_accessed),
    )(x_bf, eps, packed["w"], packed["bias"])

    recon = out[:, :n1]
    mu = out[:, n1:n1 + latent]
    logvar = out[:, n1 + latent:n1 + 2 * latent]
    return recon, mu, logvar


def init_params(key, n1, n2, n3, latent):
    """Deterministic init. Weights stored as (in, out) = PyTorch W.T, biases (1, out)."""
    dims = {
        "1": (n1, n2),
        "11": (n2, n3),
        "21": (n3, latent),
        "22": (n3, latent),
        "3": (latent, n3),
        "33": (n3, n2),
        "4": (n2, n1),
    }
    params = {}
    for name, (fin, fout) in dims.items():
        key, kw, kb = jax.random.split(key, 3)
        bound = 1.0 / jnp.sqrt(fin)  # PyTorch nn.Linear default init range
        params[f"w{name}"] = jax.random.uniform(
            kw, (fin, fout), jnp.float32, -bound, bound)
        params[f"b{name}"] = jax.random.uniform(
            kb, (1, fout), jnp.float32, -bound, bound)
    return params


if __name__ == "__main__":
    # Small shapes consistent with the module; batch large enough to exercise the grid.
    B, n1, n2, n3, latent = 256, 64, 48, 32, 16

    key = jax.random.PRNGKey(0)
    k_x, k_eps, k_p = jax.random.split(key, 3)

    x = jax.random.uniform(k_x, (B, n1), jnp.float32)          # MNIST-like pixels in [0,1]
    eps = jax.random.normal(k_eps, (B, latent), jnp.float32)   # reparam noise (explicit input)
    params = init_params(k_p, n1, n2, n3, latent)
    packed = pack_params(params, n1, n2, n3, latent)

    recon, mu, logvar = vae_forward(x, packed, eps)
    jax.block_until_ready((recon, mu, logvar))

    # Pure-JAX reference with the same bf16-matmul / f32-accumulate recipe.
    def mm(a, w):
        return jnp.dot(a.astype(jnp.bfloat16), w.astype(jnp.bfloat16),
                       preferred_element_type=jnp.float32)

    h11 = jnp.maximum(mm(x, params["w1"]) + params["b1"], 0.0)
    h1 = jnp.maximum(mm(h11, params["w11"]) + params["b11"], 0.0)
    mu_r = mm(h1, params["w21"]) + params["b21"]
    lv_r = mm(h1, params["w22"]) + params["b22"]
    z = eps * jnp.exp(0.5 * lv_r) + mu_r
    h33 = jax.nn.elu(mm(z, params["w3"]) + params["b3"])
    h3 = jax.nn.elu(mm(h33, params["w33"]) + params["b33"])
    rec_r = jax.nn.sigmoid(mm(h3, params["w4"]) + params["b4"])

    # bf16 matmul inputs (+ bf16 activations on v6e/v7x, approx vrcp) -> bf16-level tolerances.
    assert jnp.allclose(mu, mu_r, rtol=3e-2, atol=3e-2)
    assert jnp.allclose(logvar, lv_r, rtol=3e-2, atol=3e-2)
    assert jnp.allclose(recon, rec_r, rtol=3e-2, atol=3e-2)

    print("KERNEL_OK")
</pallas_src>

<mosaic_0001>
module attributes {stable_mosaic.version = 11 : i64} {
  func.func @kernel(%arg0: i32, %arg1: memref<256x64xbf16, #tpu.memory_space<vmem>>, %arg2: memref<256x16xf32, #tpu.memory_space<vmem>>, %arg3: memref<240x64xbf16, #tpu.memory_space<vmem>>, %arg4: memref<8x64xf32, #tpu.memory_space<vmem>>, %arg5: memref<256x128xf32, #tpu.memory_space<vmem>>) attributes {dimension_semantics = [#tpu.dimension_semantics<parallel>], iteration_bounds = array<i64: 1>, scalar_prefetch = 0 : i64, scratch_operands = 0 : i64, tpu.core_type = #tpu.core_type<tc>, window_params = [{transform_indices = @transform_0, window_bounds = array<i64: 256, 64>}, {transform_indices = @transform_1, window_bounds = array<i64: 256, 16>}, {pipeline_mode = #tpu.pipeline_mode<synchronous>, transform_indices = @transform_2, window_bounds = array<i64: 240, 64>}, {pipeline_mode = #tpu.pipeline_mode<synchronous>, transform_indices = @transform_3, window_bounds = array<i64: 8, 64>}, {transform_indices = @transform_4, window_bounds = array<i64: 256, 128>}]} {
    %c0 = arith.constant 0 : index
    %c0_0 = arith.constant 0 : index
    %0 = vector.load %arg1[%c0, %c0_0] : memref<256x64xbf16, #tpu.memory_space<vmem>>, vector<256x64xbf16>
    %c0_1 = arith.constant 0 : index
    %c0_2 = arith.constant 0 : index
    %1 = vector.load %arg2[%c0_1, %c0_2] : memref<256x16xf32, #tpu.memory_space<vmem>>, vector<256x16xf32>
    %c0_3 = arith.constant 0 : index
    %c0_4 = arith.constant 0 : index
    %2 = vector.load %arg4[%c0_3, %c0_4] : memref<8x64xf32, #tpu.memory_space<vmem>>, vector<8x64xf32>
    %3 = vector.extract_strided_slice %2 {offsets = [0, 0], sizes = [1, 48], strides = [1, 1]} : vector<8x64xf32> to vector<1x48xf32>
    %4 = vector.extract_strided_slice %2 {offsets = [1, 0], sizes = [1, 32], strides = [1, 1]} : vector<8x64xf32> to vector<1x32xf32>
    %5 = vector.extract_strided_slice %2 {offsets = [2, 0], sizes = [1, 32], strides = [1, 1]} : vector<8x64xf32> to vector<1x32xf32>
    %6 = vector.extract_strided_slice %2 {offsets = [3, 0], sizes = [1, 32], strides = [1, 1]} : vector<8x64xf32> to vector<1x32xf32>
    %7 = vector.extract_strided_slice %2 {offsets = [4, 0], sizes = [1, 48], strides = [1, 1]} : vector<8x64xf32> to vector<1x48xf32>
    %8 = vector.extract_strided_slice %2 {offsets = [5, 0], sizes = [1, 64], strides = [1, 1]} : vector<8x64xf32> to vector<1x64xf32>
    %c0_5 = arith.constant 0 : index
    %c0_6 = arith.constant 0 : index
    %9 = vector.load %arg3[%c0_5, %c0_6] : memref<240x64xbf16, #tpu.memory_space<vmem>>, vector<64x48xbf16>
    %c64 = arith.constant 64 : index
    %c0_7 = arith.constant 0 : index
    %10 = vector.load %arg3[%c64, %c0_7] : memref<240x64xbf16, #tpu.memory_space<vmem>>, vector<48x32xbf16>
    %c112 = arith.constant 112 : index
    %c0_8 = arith.constant 0 : index
    %11 = vector.load %arg3[%c112, %c0_8] : memref<240x64xbf16, #tpu.memory_space<vmem>>, vector<32x32xbf16>
    %c144 = arith.constant 144 : index
    %c0_9 = arith.constant 0 : index
    %12 = vector.load %arg3[%c144, %c0_9] : memref<240x64xbf16, #tpu.memory_space<vmem>>, vector<16x32xbf16>
    %c160 = arith.constant 160 : index
    %c0_10 = arith.constant 0 : index
    %13 = vector.load %arg3[%c160, %c0_10] : memref<240x64xbf16, #tpu.memory_space<vmem>>, vector<32x48xbf16>
    %c192 = arith.constant 192 : index
    %c0_11 = arith.constant 0 : index
    %14 = vector.load %arg3[%c192, %c0_11] : memref<240x64xbf16, #tpu.memory_space<vmem>>, vector<48x64xbf16>
    %cst = arith.constant dense<0.000000e+00> : vector<256x48xf32>
    %15 = tpu.matmul %0, %9, %cst {dimension_numbers = #tpu.dot_dimension_numbers<[1], [0], [0], [1], [0, 0, 1, 1], [], []>} : vector<256x64xbf16>, vector<64x48xbf16>, vector<256x48xf32> -> vector<256x48xf32>
    %16 = vector.broadcast %3 : vector<1x48xf32> to vector<256x48xf32>
    %17 = arith.addf %15, %16 : vector<256x48xf32>
    %cst_12 = arith.constant 0.000000e+00 : f32
    %18 = vector.broadcast %cst_12 : f32 to vector<256x48xf32>
    %19 = arith.maximumf %17, %18 : vector<256x48xf32>
    %20 = arith.truncf %19 : vector<256x48xf32> to vector<256x48xbf16>
    %cst_13 = arith.constant dense<0.000000e+00> : vector<256x32xf32>
    %21 = tpu.matmul %20, %10, %cst_13 {dimension_numbers = #tpu.dot_dimension_numbers<[1], [0], [0], [1], [0, 0, 1, 1], [], []>} : vector<256x48xbf16>, vector<48x32xbf16>, vector<256x32xf32> -> vector<256x32xf32>
    %22 = vector.broadcast %4 : vector<1x32xf32> to vector<256x32xf32>
    %23 = arith.addf %21, %22 : vector<256x32xf32>
    %cst_14 = arith.constant 0.000000e+00 : f32
    %24 = vector.broadcast %cst_14 : f32 to vector<256x32xf32>
    %25 = arith.maximumf %23, %24 : vector<256x32xf32>
    %26 = arith.truncf %25 : vector<256x32xf32> to vector<256x32xbf16>
    %cst_15 = arith.constant dense<0.000000e+00> : vector<256x32xf32>
    %27 = tpu.matmul %26, %11, %cst_15 {dimension_numbers = #tpu.dot_dimension_numbers<[1], [0], [0], [1], [0, 0, 1, 1], [], []>} : vector<256x32xbf16>, vector<32x32xbf16>, vector<256x32xf32> -> vector<256x32xf32>
    %28 = vector.broadcast %5 : vector<1x32xf32> to vector<256x32xf32>
    %29 = arith.addf %27, %28 : vector<256x32xf32>
    %30 = vector.extract_strided_slice %29 {offsets = [0, 0], sizes = [256, 16], strides = [1, 1]} : vector<256x32xf32> to vector<256x16xf32>
    %31 = vector.extract_strided_slice %29 {offsets = [0, 16], sizes = [256, 16], strides = [1, 1]} : vector<256x32xf32> to vector<256x16xf32>
    %cst_16 = arith.constant 5.000000e-01 : f32
    %32 = vector.broadcast %cst_16 : f32 to vector<256x16xf32>
    %33 = arith.mulf %32, %31 : vector<256x16xf32>
    %34 = math.exp %33 : vector<256x16xf32>
    %35 = arith.mulf %1, %34 : vector<256x16xf32>
    %36 = arith.addf %35, %30 : vector<256x16xf32>
    %37 = arith.truncf %36 : vector<256x16xf32> to vector<256x16xbf16>
    %cst_17 = arith.constant dense<0.000000e+00> : vector<256x32xf32>
    %38 = tpu.matmul %37, %12, %cst_17 {dimension_numbers = #tpu.dot_dimension_numbers<[1], [0], [0], [1], [0, 0, 1, 1], [], []>} : vector<256x16xbf16>, vector<16x32xbf16>, vector<256x32xf32> -> vector<256x32xf32>
    %39 = vector.broadcast %6 : vector<1x32xf32> to vector<256x32xf32>
    %40 = arith.addf %38, %39 : vector<256x32xf32>
    %cst_18 = arith.constant 0.000000e+00 : f32
    %41 = vector.broadcast %cst_18 : f32 to vector<256x32xf32>
    %42 = arith.cmpf ogt, %40, %41 : vector<256x32xf32>
    %cst_19 = arith.constant 0.000000e+00 : f32
    %43 = vector.broadcast %cst_19 : f32 to vector<256x32xf32>
    %44 = arith.minimumf %40, %43 : vector<256x32xf32>
    %45 = math.exp %44 : vector<256x32xf32>
    %cst_20 = arith.constant 1.000000e+00 : f32
    %46 = vector.broadcast %cst_20 : f32 to vector<256x32xf32>
    %47 = arith.subf %45, %46 : vector<256x32xf32>
    %48 = arith.select %42, %40, %47 : vector<256x32xi1>, vector<256x32xf32>
    %49 = arith.truncf %48 : vector<256x32xf32> to vector<256x32xbf16>
    %cst_21 = arith.constant dense<0.000000e+00> : vector<256x48xf32>
    %50 = tpu.matmul %49, %13, %cst_21 {dimension_numbers = #tpu.dot_dimension_numbers<[1], [0], [0], [1], [0, 0, 1, 1], [], []>} : vector<256x32xbf16>, vector<32x48xbf16>, vector<256x48xf32> -> vector<256x48xf32>
    %51 = vector.broadcast %7 : vector<1x48xf32> to vector<256x48xf32>
    %52 = arith.addf %50, %51 : vector<256x48xf32>
    %cst_22 = arith.constant 0.000000e+00 : f32
    %53 = vector.broadcast %cst_22 : f32 to vector<256x48xf32>
    %54 = arith.cmpf ogt, %52, %53 : vector<256x48xf32>
    %cst_23 = arith.constant 0.000000e+00 : f32
    %55 = vector.broadcast %cst_23 : f32 to vector<256x48xf32>
    %56 = arith.minimumf %52, %55 : vector<256x48xf32>
    %57 = math.exp %56 : vector<256x48xf32>
    %cst_24 = arith.constant 1.000000e+00 : f32
    %58 = vector.broadcast %cst_24 : f32 to vector<256x48xf32>
    %59 = arith.subf %57, %58 : vector<256x48xf32>
    %60 = arith.select %54, %52, %59 : vector<256x48xi1>, vector<256x48xf32>
    %61 = arith.truncf %60 : vector<256x48xf32> to vector<256x48xbf16>
    %cst_25 = arith.constant dense<0.000000e+00> : vector<256x64xf32>
    %62 = tpu.matmul %61, %14, %cst_25 {dimension_numbers = #tpu.dot_dimension_numbers<[1], [0], [0], [1], [0, 0, 1, 1], [], []>} : vector<256x48xbf16>, vector<48x64xbf16>, vector<256x64xf32> -> vector<256x64xf32>
    %63 = vector.broadcast %8 : vector<1x64xf32> to vector<256x64xf32>
    %64 = arith.addf %62, %63 : vector<256x64xf32>
    %cst_26 = arith.constant 0.000000e+00 : f32
    %65 = vector.broadcast %cst_26 : f32 to vector<256x64xf32>
    %66 = arith.subf %65, %64 : vector<256x64xf32>
    %67 = math.exp %66 : vector<256x64xf32>
    %cst_27 = arith.constant 1.000000e+00 : f32
    %68 = vector.broadcast %cst_27 : f32 to vector<256x64xf32>
    %69 = arith.addf %68, %67 : vector<256x64xf32>
    %70 = tpu.reciprocal %69 {approx = true} : vector<256x64xf32> -> vector<256x64xf32>
    %cst_28 = arith.constant 0.000000e+00 : f32
    %71 = vector.broadcast %cst_28 : f32 to vector<256x32xf32>
    %72 = tpu.concatenate %70, %29, %71 in 1 : vector<256x64xf32>, vector<256x32xf32>, vector<256x32xf32> -> vector<256x128xf32>
    %c0_29 = arith.constant 0 : index
    %c0_30 = arith.constant 0 : index
    %73 = vector.load %arg5[%c0_29, %c0_30] : memref<256x128xf32, #tpu.memory_space<vmem>>, vector<256x128xf32>
    tpu.vector_store %arg5[%c0_29, %c0_30], %72 {strides = array<i32>} : memref<256x128xf32, #tpu.memory_space<vmem>>, vector<256x128xf32>,
    return
  }
  func.func @transform_0(%arg0: i32) -> (i32, i32) {
    %c0_i32 = arith.constant 0 : i32
    %c0_i32_0 = arith.constant 0 : i32
    return %arg0, %c0_i32 : i32, i32
  }
  func.func @transform_1(%arg0: i32) -> (i32, i32) {
    %c0_i32 = arith.constant 0 : i32
    %c0_i32_0 = arith.constant 0 : i32
    return %arg0, %c0_i32 : i32, i32
  }
  func.func @transform_2(%arg0: i32) -> (i32, i32) {
    %c0_i32 = arith.constant 0 : i32
    %c0_i32_0 = arith.constant 0 : i32
    %c0_i32_1 = arith.constant 0 : i32
    return %c0_i32, %c0_i32_0 : i32, i32
  }
  func.func @transform_3(%arg0: i32) -> (i32, i32) {
    %c0_i32 = arith.constant 0 : i32
    %c0_i32_0 = arith.constant 0 : i32
    %c0_i32_1 = arith.constant 0 : i32
    return %c0_i32, %c0_i32_0 : i32, i32
  }
  func.func @transform_4(%arg0: i32) -> (i32, i32) {
    %c0_i32 = arith.constant 0 : i32
    %c0_i32_0 = arith.constant 0 : i32
    return %arg0, %c0_i32 : i32, i32
  }
}

</mosaic_0001>

<llo_original>
// kernel: tpu_custom_call.1
$region0: #{tpu_custom_call.1}
  #allocation0 [shape = 'u32[]', space=smem, size = 0x4, offset = 0x4, fixed_abs, tag = 'smem constant byte address 0x4 - core index']
  #allocation1 [shape = 'u32[144,128]{1,0:T(1,128)}', space=vmem, size = 0x12000, scoped, tag = 'internal scratch']
  %s0 = inlined_call_operand.vmem [shape: bf16[256,64], index: 0, kind: input, shape index: {}]
  %s1 = inlined_call_operand.vmem [shape: f32[256,16], index: 1, kind: input, shape index: {}]
  %s2 = inlined_call_operand.vmem [shape: bf16[240,64], index: 2, kind: input, shape index: {}]
  %s3 = inlined_call_operand.vmem [shape: f32[8,64], index: 3, kind: input, shape index: {}]
  %s4 = inlined_call_operand.hbm [shape: f32[256,128], index: 4, kind: output, shape index: {}]
  %s5 = sld [smem:[#allocation0]]
  $region26: #{tpu_custom_call.1} parent=0
    _
  %s7 = ssub.s32 1, %s5
  %s8 = scalar_select 0, %s7, %s5
  $region1: #{tpu_custom_call.1} parent=0
    #allocation2 [shape = 'u8[131072]{0}', space=vmem, size = 0x20000, scoped, tag = 'output window, operand 0, single buffered']
    #allocation3 [shape = 's32[1]{0}', space=sflag, size = 0x4, scoped, tag = 'scoped memory for tpu_custom_call.1']
    %9 = vsyncpa [#allocation3], 0
    // Predicated region
    $region2: #{tpu_custom_call.1} parent=1 // pred_check
      _
    $region3: #{tpu_custom_call.1} parent=1 // pred_check_branch
      %11 = sbr.rel (0) target = $region5
    $region4: #{tpu_custom_call.1} parent=1 // pred_region
      _
    $region5: #{tpu_custom_call.1} parent=1 // pred_fallthru
      _
    // Predicated region
    $region6: #{tpu_custom_call.1} parent=1 // pred_check
      _
    $region7: #{tpu_custom_call.1} parent=1 // pred_check_branch
      %13 = sbr.rel (0) target = $region9
    $region8: #{tpu_custom_call.1} parent=1 // pred_region
      _
    $region9: #{tpu_custom_call.1} parent=1 // pred_fallthru
      _
    // Predicated region
    $region10: #{tpu_custom_call.1} parent=1 // pred_check
      _
    $region11: #{tpu_custom_call.1} parent=1 // pred_check_branch
      %15 = sbr.rel (0) target = $region13
    $region12: #{tpu_custom_call.1} parent=1 // pred_region
      _
    $region13: #{tpu_custom_call.1} parent=1 // pred_fallthru
      _
    // Predicated region
    $region14: #{tpu_custom_call.1} parent=1 // pred_check
      _
    $region15: #{tpu_custom_call.1} parent=1 // pred_check_branch
      %17 = sbr.rel (0) target = $region17
    $region16: #{tpu_custom_call.1} parent=1 // pred_region
      _
    $region17: #{tpu_custom_call.1} parent=1 // pred_fallthru
      _
    %v19 = vld [vmem:[%s0] sm:$0xf]
    %v20 = vld [vmem:[%s0 + $0x4] sm:$0xf]
    %v21 = vld [vmem:[%s0 + $0x8] sm:$0xf]
    %v22 = vld [vmem:[%s0 + $0xc] sm:$0xf]
    %v23 = vld [vmem:[%s0 + $0x10] sm:$0xf]
    %v24 = vld [vmem:[%s0 + $0x14] sm:$0xf]
    %v25 = vld [vmem:[%s0 + $0x18] sm:$0xf]
    %v26 = vld [vmem:[%s0 + $0x1c] sm:$0xf]
    %v27 = vld [vmem:[%s0 + $0x20] sm:$0xf]
    %v28 = vld [vmem:[%s0 + $0x24] sm:$0xf]
    %v29 = vld [vmem:[%s0 + $0x28] sm:$0xf]
    %v30 = vld [vmem:[%s0 + $0x2c] sm:$0xf]
    %v31 = vld [vmem:[%s0 + $0x30] sm:$0xf]
    %v32 = vld [vmem:[%s0 + $0x34] sm:$0xf]
    %v33 = vld [vmem:[%s0 + $0x38] sm:$0xf]
    %v34 = vld [vmem:[%s0 + $0x3c] sm:$0xf]
    %v35 = vld [vmem:[%s0 + $0x40] sm:$0xf]
    %v36 = vld [vmem:[%s0 + $0x44] sm:$0xf]
    %v37 = vld [vmem:[%s0 + $0x48] sm:$0xf]
    %v38 = vld [vmem:[%s0 + $0x4c] sm:$0xf]
    %v39 = vld [vmem:[%s0 + $0x50] sm:$0xf]
    %v40 = vld [vmem:[%s0 + $0x54] sm:$0xf]
    %v41 = vld [vmem:[%s0 + $0x58] sm:$0xf]
    %v42 = vld [vmem:[%s0 + $0x5c] sm:$0xf]
    %v43 = vld [vmem:[%s0 + $0x60] sm:$0xf]
    %v44 = vld [vmem:[%s0 + $0x64] sm:$0xf]
    %v45 = vld [vmem:[%s0 + $0x68] sm:$0xf]
    %v46 = vld [vmem:[%s0 + $0x6c] sm:$0xf]
    %v47 = vld [vmem:[%s0 + $0x70] sm:$0xf]
    %v48 = vld [vmem:[%s0 + $0x74] sm:$0xf]
    %v49 = vld [vmem:[%s0 + $0x78] sm:$0xf]
    %v50 = vld [vmem:[%s0 + $0x7c] sm:$0xf]
    %v51 = vld [vmem:[%s1] sm:$0xff]
    %v52 = vld [vmem:[%s1 + $0x8] sm:$0xff]
    %v53 = vld [vmem:[%s1 + $0x10] sm:$0xff]
    %v54 = vld [vmem:[%s1 + $0x18] sm:$0xff]
    %v55 = vld [vmem:[%s1 + $0x20] sm:$0xff]
    %v56 = vld [vmem:[%s1 + $0x28] sm:$0xff]
    %v57 = vld [vmem:[%s1 + $0x30] sm:$0xff]
    %v58 = vld [vmem:[%s1 + $0x38] sm:$0xff]
    %v59 = vld [vmem:[%s1 + $0x40] sm:$0xff]
    %v60 = vld [vmem:[%s1 + $0x48] sm:$0xff]
    %v61 = vld [vmem:[%s1 + $0x50] sm:$0xff]
    %v62 = vld [vmem:[%s1 + $0x58] sm:$0xff]
    %v63 = vld [vmem:[%s1 + $0x60] sm:$0xff]
    %v64 = vld [vmem:[%s1 + $0x68] sm:$0xff]
    %v65 = vld [vmem:[%s1 + $0x70] sm:$0xff]
    %v66 = vld [vmem:[%s1 + $0x78] sm:$0xff]
    %v67 = vld [vmem:[%s1 + $0x80] sm:$0xff]
    %v68 = vld [vmem:[%s1 + $0x88] sm:$0xff]
    %v69 = vld [vmem:[%s1 + $0x90] sm:$0xff]
    %v70 = vld [vmem:[%s1 + $0x98] sm:$0xff]
    %v71 = vld [vmem:[%s1 + $0xa0] sm:$0xff]
    %v72 = vld [vmem:[%s1 + $0xa8] sm:$0xff]
    %v73 = vld [vmem:[%s1 + $0xb0] sm:$0xff]
    %v74 = vld [vmem:[%s1 + $0xb8] sm:$0xff]
    %v75 = vld [vmem:[%s1 + $0xc0] sm:$0xff]
    %v76 = vld [vmem:[%s1 + $0xc8] sm:$0xff]
    %v77 = vld [vmem:[%s1 + $0xd0] sm:$0xff]
    %v78 = vld [vmem:[%s1 + $0xd8] sm:$0xff]
    %v79 = vld [vmem:[%s1 + $0xe0] sm:$0xff]
    %v80 = vld [vmem:[%s1 + $0xe8] sm:$0xff]
    %v81 = vld [vmem:[%s1 + $0xf0] sm:$0xff]
    %v82 = vld [vmem:[%s1 + $0xf8] sm:$0xff]
    %v83 = vld [vmem:[%s3] sm:$0xff]
    %v84 = vld [vmem:[%s2] sm:$0xf]
    %v85 = vld [vmem:[%s2 + $0x4] sm:$0xf]
    %v86 = vld [vmem:[%s2 + $0x8] sm:$0xf]
    %v87 = vld [vmem:[%s2 + $0xc] sm:$0xf]
    %v88 = vld [vmem:[%s2 + $0x10] sm:$0xf]
    %v89 = vld [vmem:[%s2 + $0x14] sm:$0xf]
    %v90 = vld [vmem:[%s2 + $0x18] sm:$0xf]
    %v91 = vld [vmem:[%s2 + $0x1c] sm:$0xf]
    %v92 = vld [vmem:[%s2 + $0x20] sm:$0xf]
    %v93 = vld [vmem:[%s2 + $0x24] sm:$0xf]
    %v94 = vld [vmem:[%s2 + $0x28] sm:$0xf]
    %v95 = vld [vmem:[%s2 + $0x2c] sm:$0xf]
    %v96 = vld [vmem:[%s2 + $0x30] sm:$0xf]
    %v97 = vld [vmem:[%s2 + $0x34] sm:$0xf]
    %v98 = vld [vmem:[%s2 + $0x38] sm:$0xf]
    %v99 = vld [vmem:[%s2 + $0x3c] sm:$0xf]
    %v100 = vld [vmem:[%s2 + $0x40] sm:$0xf]
    %v101 = vld [vmem:[%s2 + $0x44] sm:$0xf]
    %v102 = vld [vmem:[%s2 + $0x48] sm:$0xf]
    %v103 = vld [vmem:[%s2 + $0x4c] sm:$0xf]
    %v104 = vld [vmem:[%s2 + $0x50] sm:$0xf]
    %v105 = vld [vmem:[%s2 + $0x54] sm:$0xf]
    %v106 = vld [vmem:[%s2 + $0x58] sm:$0xf]
    %v107 = vld [vmem:[%s2 + $0x5c] sm:$0xf]
    %v108 = vld [vmem:[%s2 + $0x60] sm:$0xf]
    %v109 = vld [vmem:[%s2 + $0x64] sm:$0xf]
    %v110 = vld [vmem:[%s2 + $0x68] sm:$0xf]
    %v111 = vld [vmem:[%s2 + $0x6c] sm:$0xf]
    %v112 = vld [vmem:[%s2 + $0x70] sm:$0xf]
    %v113 = vld [vmem:[%s2 + $0x74] sm:$0xf]
    %v114 = vlaneseq
    %v115 = vshrl.u32 %v114, 7
    %v116 = vsub.s32 0, %v115
    %v117 = vrot.slane %v83, %v116
    %v150 = vunpack.c.l.b16 %v19
    %v151 = vunpack.c.l.b16 %v20
    %v152 = vunpack.c.l.b16 %v21
    %v153 = vunpack.c.l.b16 %v22
    %v154 = vunpack.c.l.b16 %v23
    %v155 = vunpack.c.l.b16 %v24
    %v156 = vunpack.c.l.b16 %v25
    %v157 = vunpack.c.l.b16 %v26
    %v158 = vunpack.c.l.b16 %v27
    %v159 = vunpack.c.l.b16 %v28
    %v160 = vunpack.c.l.b16 %v29
    %v161 = vunpack.c.l.b16 %v30
    %v162 = vunpack.c.l.b16 %v31
    %v163 = vunpack.c.l.b16 %v32
    %v164 = vunpack.c.l.b16 %v33
    %v165 = vunpack.c.l.b16 %v34
    %v166 = vunpack.c.l.b16 %v35
    %v167 = vunpack.c.l.b16 %v36
    %v168 = vunpack.c.l.b16 %v37
    %v169 = vunpack.c.l.b16 %v38
    %v170 = vunpack.c.l.b16 %v39
    %v171 = vunpack.c.l.b16 %v40
    %v172 = vunpack.c.l.b16 %v41
    %v173 = vunpack.c.l.b16 %v42
    %v174 = vunpack.c.l.b16 %v43
    %v175 = vunpack.c.l.b16 %v44
    %v176 = vunpack.c.l.b16 %v45
    %v177 = vunpack.c.l.b16 %v46
    %v178 = vunpack.c.l.b16 %v47
    %v179 = vunpack.c.l.b16 %v48
    %v180 = vunpack.c.l.b16 %v49
    %v181 = vunpack.c.l.b16 %v50
    %v182 = vpack.c.b16 %v151, %v150
    %v183 = vpack.c.b16 %v153, %v152
    %v184 = vpack.c.b16 %v155, %v154
    %v185 = vpack.c.b16 %v157, %v156
    %v186 = vpack.c.b16 %v159, %v158
    %v187 = vpack.c.b16 %v161, %v160
    %v188 = vpack.c.b16 %v163, %v162
    %v189 = vpack.c.b16 %v165, %v164
    %v190 = vpack.c.b16 %v167, %v166
    %v191 = vpack.c.b16 %v169, %v168
    %v192 = vpack.c.b16 %v171, %v170
    %v193 = vpack.c.b16 %v173, %v172
    %v194 = vpack.c.b16 %v175, %v174
    %v195 = vpack.c.b16 %v177, %v176
    %v196 = vpack.c.b16 %v179, %v178
    %v197 = vpack.c.b16 %v181, %v180
    %v206 = vunpack.c.l.b16 %v84
    %v207 = vunpack.c.l.b16 %v85
    %v208 = vunpack.c.l.b16 %v86
    %v209 = vunpack.c.l.b16 %v87
    %v210 = vunpack.c.l.b16 %v88
    %v211 = vunpack.c.l.b16 %v89
    %v212 = vunpack.c.l.b16 %v90
    %v213 = vunpack.c.l.b16 %v91
    %v214 = vpack.c.b16 %v207, %v206
    %v215 = vpack.c.b16 %v209, %v208
    %v216 = vpack.c.b16 %v211, %v210
    %v217 = vpack.c.b16 %v213, %v212
    %vm222 = vcmask 523264
    %v224 = vsel %vm222, %v182, 0
    %v227 = vsel %vm222, %v183, 0
    %v230 = vsel %vm222, %v184, 0
    %v233 = vsel %vm222, %v185, 0
    %v236 = vsel %vm222, %v186, 0
    %v239 = vsel %vm222, %v187, 0
    %v242 = vsel %vm222, %v188, 0
    %v245 = vsel %vm222, %v189, 0
    %v248 = vsel %vm222, %v190, 0
    %v251 = vsel %vm222, %v191, 0
    %v254 = vsel %vm222, %v192, 0
    %v257 = vsel %vm222, %v193, 0
    %v260 = vsel %vm222, %v194, 0
    %v263 = vsel %vm222, %v195, 0
    %v266 = vsel %vm222, %v196, 0
    %v269 = vsel %vm222, %v197, 0
    %271 = vmatprep.subr.bf16.mxu0 0
    %272 = vmatpush1.bf16.msra.mxu0 %v214
    %273 = vmatprep.subr.bf16.mxu0 0
    %274 = vmatpush1.bf16.msra.mxu0 %v215
    %275 = vmatprep.subr.bf16.mxu0 0
    %276 = vmatpush1.bf16.msra.mxu0 %v216
    %277 = vmatprep.subr.bf16.mxu0 0
    %278 = vmatpush1.bf16.msra.mxu0 %v217
    %279 = vmatprep.subr.bf16.mxu0 0
    %280 = vmatpush1.bf16.msra.mxu0 0
    %281 = vmatprep.subr.bf16.mxu0 0
    %282 = vmatpush1.bf16.msra.mxu0 0
    %283 = vmatprep.subr.bf16.mxu0 0
    %284 = vmatpush1.bf16.msra.mxu0 0
    %285 = vmatprep.subr.bf16.mxu0 0
    %286 = vmatpush1.bf16.msra.mxu0 0
    %287 = vmatprep.subr.bf16.mxu0 0
    %288 = vmatpush1.bf16.msra.mxu0 0
    %289 = vmatprep.subr.bf16.mxu0 0
    %290 = vmatpush1.bf16.msra.mxu0 0
    %291 = vmatprep.subr.bf16.mxu0 0
    %292 = vmatpush1.bf16.msra.mxu0 0
    %293 = vmatprep.subr.bf16.mxu0 0
    %294 = vmatpush1.bf16.msra.mxu0 0
    %295 = vmatprep.subr.bf16.mxu0 0
    %296 = vmatpush1.bf16.msra.mxu0 0
    %297 = vmatprep.subr.bf16.mxu0 0
    %298 = vmatpush1.bf16.msra.mxu0 0
    %299 = vmatprep.subr.bf16.mxu0 0
    %300 = vmatpush1.bf16.msra.mxu0 0
    %301 = vmatprep.subr.bf16.mxu0 0
    %302 = vmatpush1.bf16.msra.mxu0 0
    %303 = vmatprep.mubr.bf16.mxu0 0
    %304 = vmatmul.mubr.bf16.gmra.mrb[0].mxu0 %v224
    %v305 = vpop.f32.mrb[0].mxu0
    %v306 = vadd.f32 %v117, %v305
    %v307 = vpop.f32.mrb[0].mxu0
    %v308 = vpop.f32.mrb[0].mxu0
    %v309 = vadd.f32 %v117, %v308
    %v310 = vpop.f32.mrb[0].mxu0
    %311 = vmatprep.mubr.bf16.mxu0 0
    %312 = vmatmul.mubr.bf16.gmra.mrb[0].mxu0 %v227
    %v313 = vpop.f32.mrb[0].mxu0
    %v314 = vadd.f32 %v117, %v313
    %v315 = vpop.f32.mrb[0].mxu0
    %v316 = vpop.f32.mrb[0].mxu0
    %v317 = vadd.f32 %v117, %v316
    %v318 = vpop.f32.mrb[0].mxu0
    %319 = vmatprep.mubr.bf16.mxu0 0
    %320 = vmatmul.mubr.bf16.gmra.mrb[0].mxu0 %v230
    %v321 = vpop.f32.mrb[0].mxu0
    %v322 = vadd.f32 %v117, %v321
    %v323 = vpop.f32.mrb[0].mxu0
    %v324 = vpop.f32.mrb[0].mxu0
    %v325 = vadd.f32 %v117, %v324
    %v326 = vpop.f32.mrb[0].mxu0
    %327 = vmatprep.mubr.bf16.mxu0 0
    %328 = vmatmul.mubr.bf16.gmra.mrb[0].mxu0 %v233
    %v329 = vpop.f32.mrb[0].mxu0
    %v330 = vadd.f32 %v117, %v329
    %v331 = vpop.f32.mrb[0].mxu0
    %v332 = vpop.f32.mrb[0].mxu0
    %v333 = vadd.f32 %v117, %v332
    %v334 = vpop.f32.mrb[0].mxu0
    %335 = vmatprep.mubr.bf16.mxu0 0
    %336 = vmatmul.mubr.bf16.gmra.mrb[0].mxu0 %v236
    %v337 = vpop.f32.mrb[0].mxu0
    %v338 = vadd.f32 %v117, %v337
    %v339 = vpop.f32.mrb[0].mxu0
    %v340 = vpop.f32.mrb[0].mxu0
    %v341 = vadd.f32 %v117, %v340
    %v342 = vpop.f32.mrb[0].mxu0
    %343 = vmatprep.mubr.bf16.mxu0 0
    %344 = vmatmul.mubr.bf16.gmra.mrb[0].mxu0 %v239
    %v345 = vpop.f32.mrb[0].mxu0
    %v346 = vadd.f32 %v117, %v345
    %v347 = vpop.f32.mrb[0].mxu0
    %v348 = vpop.f32.mrb[0].mxu0
    %v349 = vadd.f32 %v117, %v348
    %v350 = vpop.f32.mrb[0].mxu0
    %351 = vmatprep.mubr.bf16.mxu0 0
    %352 = vmatmul.mubr.bf16.gmra.mrb[0].mxu0 %v242
    %v353 = vpop.f32.mrb[0].mxu0
    %v354 = vadd.f32 %v117, %v353
    %v355 = vpop.f32.mrb[0].mxu0
    %v356 = vpop.f32.mrb[0].mxu0
    %v357 = vadd.f32 %v117, %v356
    %v358 = vpop.f32.mrb[0].mxu0
    %359 = vmatprep.mubr.bf16.mxu0 0
    %360 = vmatmul.mubr.bf16.gmra.mrb[0].mxu0 %v245
    %v361 = vpop.f32.mrb[0].mxu0
    %v362 = vadd.f32 %v117, %v361
    %v363 = vpop.f32.mrb[0].mxu0
    %v364 = vpop.f32.mrb[0].mxu0
    %v365 = vadd.f32 %v117, %v364
    %v366 = vpop.f32.mrb[0].mxu0
    %367 = vmatprep.mubr.bf16.mxu0 0
    %368 = vmatmul.mubr.bf16.gmra.mrb[0].mxu0 %v248
    %v369 = vpop.f32.mrb[0].mxu0
    %v370 = vadd.f32 %v117, %v369
    %v371 = vpop.f32.mrb[0].mxu0
    %v372 = vpop.f32.mrb[0].mxu0
    %v373 = vadd.f32 %v117, %v372
    %v374 = vpop.f32.mrb[0].mxu0
    %375 = vmatprep.mubr.bf16.mxu0 0
    %376 = vmatmul.mubr.bf16.gmra.mrb[0].mxu0 %v251
    %v377 = vpop.f32.mrb[0].mxu0
    %v378 = vadd.f32 %v117, %v377
    %v379 = vpop.f32.mrb[0].mxu0
    %v380 = vpop.f32.mrb[0].mxu0
    %v381 = vadd.f32 %v117, %v380
    %v382 = vpop.f32.mrb[0].mxu0
    %383 = vmatprep.mubr.bf16.mxu0 0
    %384 = vmatmul.mubr.bf16.gmra.mrb[0].mxu0 %v254
    %v385 = vpop.f32.mrb[0].mxu0
    %v386 = vadd.f32 %v117, %v385
    %v387 = vpop.f32.mrb[0].mxu0
    %v388 = vpop.f32.mrb[0].mxu0
    %v389 = vadd.f32 %v117, %v388
    %v390 = vpop.f32.mrb[0].mxu0
    %391 = vmatprep.mubr.bf16.mxu0 0
    %392 = vmatmul.mubr.bf16.gmra.mrb[0].mxu0 %v257
    %v393 = vpop.f32.mrb[0].mxu0
    %v394 = vadd.f32 %v117, %v393
    %v395 = vpop.f32.mrb[0].mxu0
    %v396 = vpop.f32.mrb[0].mxu0
    %v397 = vadd.f32 %v117, %v396
    %v398 = vpop.f32.mrb[0].mxu0
    %399 = vmatprep.mubr.bf16.mxu0 0
    %400 = vmatmul.mubr.bf16.gmra.mrb[0].mxu0 %v260
    %v401 = vpop.f32.mrb[0].mxu0
    %v402 = vadd.f32 %v117, %v401
    %v403 = vpop.f32.mrb[0].mxu0
    %v404 = vpop.f32.mrb[0].mxu0
    %v405 = vadd.f32 %v117, %v404
    %v406 = vpop.f32.mrb[0].mxu0
    %407 = vmatprep.mubr.bf16.mxu0 0
    %408 = vmatmul.mubr.bf16.gmra.mrb[0].mxu0 %v263
    %v409 = vpop.f32.mrb[0].mxu0
    %v410 = vadd.f32 %v117, %v409
    %v411 = vpop.f32.mrb[0].mxu0
    %v412 = vpop.f32.mrb[0].mxu0
    %v413 = vadd.f32 %v117, %v412
    %v414 = vpop.f32.mrb[0].mxu0
    %415 = vmatprep.mubr.bf16.mxu0 0
    %416 = vmatmul.mubr.bf16.gmra.mrb[0].mxu0 %v266
    %v417 = vpop.f32.mrb[0].mxu0
    %v418 = vadd.f32 %v117, %v417
    %v419 = vpop.f32.mrb[0].mxu0
    %v420 = vpop.f32.mrb[0].mxu0
    %v421 = vadd.f32 %v117, %v420
    %v422 = vpop.f32.mrb[0].mxu0
    %423 = vmatprep.mubr.bf16.mxu0 0
    %424 = vmatmul.mubr.bf16.gmra.mrb[0].mxu0 %v269
    %v425 = vpop.f32.mrb[0].mxu0
    %v426 = vadd.f32 %v117, %v425
    %v427 = vpop.f32.mrb[0].mxu0
    %v428 = vpop.f32.mrb[0].mxu0
    %v429 = vadd.f32 %v117, %v428
    %v430 = vpop.f32.mrb[0].mxu0
    %431 = vdwg.mxu0
    %v432 = vmax.f32 %v306, 0.0
    %v433 = vmax.f32 %v309, 0.0
    %v434 = vmax.f32 %v314, 0.0
    %v435 = vmax.f32 %v317, 0.0
    %v436 = vmax.f32 %v322, 0.0
    %v437 = vmax.f32 %v325, 0.0
    %v438 = vmax.f32 %v330, 0.0
    %v439 = vmax.f32 %v333, 0.0
    %v440 = vmax.f32 %v338, 0.0
    %v441 = vmax.f32 %v341, 0.0
    %v442 = vmax.f32 %v346, 0.0
    %v443 = vmax.f32 %v349, 0.0
    %v444 = vmax.f32 %v354, 0.0
    %v445 = vmax.f32 %v357, 0.0
    %v446 = vmax.f32 %v362, 0.0
    %v447 = vmax.f32 %v365, 0.0
    %v448 = vmax.f32 %v370, 0.0
    %v449 = vmax.f32 %v373, 0.0
    %v450 = vmax.f32 %v378, 0.0
    %v451 = vmax.f32 %v381, 0.0
    %v452 = vmax.f32 %v386, 0.0
    %v453 = vmax.f32 %v389, 0.0
    %v454 = vmax.f32 %v394, 0.0
    %v455 = vmax.f32 %v397, 0.0
    %v456 = vmax.f32 %v402, 0.0
    %v457 = vmax.f32 %v405, 0.0
    %v458 = vmax.f32 %v410, 0.0
    %v459 = vmax.f32 %v413, 0.0
    %v460 = vmax.f32 %v418, 0.0
    %v461 = vmax.f32 %v421, 0.0
    %v462 = vmax.f32 %v426, 0.0
    %v463 = vmax.f32 %v429, 0.0
    %v464 = vpack.c.bf16 %v433, %v432
    %v465 = vpack.c.bf16 %v435, %v434
    %v466 = vpack.c.bf16 %v437, %v436
    %v467 = vpack.c.bf16 %v439, %v438
    %v468 = vpack.c.bf16 %v441, %v440
    %v469 = vpack.c.bf16 %v443, %v442
    %v470 = vpack.c.bf16 %v445, %v444
    %v471 = vpack.c.bf16 %v447, %v446
    %v472 = vpack.c.bf16 %v449, %v448
    %v473 = vpack.c.bf16 %v451, %v450
    %v474 = vpack.c.bf16 %v453, %v452
    %v475 = vpack.c.bf16 %v455, %v454
    %v476 = vpack.c.bf16 %v457, %v456
    %v477 = vpack.c.bf16 %v459, %v458
    %v478 = vpack.c.bf16 %v461, %v460
    %v479 = vpack.c.bf16 %v463, %v462
    %v480 = vlaneseq
    %v481 = vshrl.u32 %v480, 7
    %v482 = vsub.s32 1, %v481
    %v483 = vrot.slane %v83, %v482
    %v490 = vunpack.c.l.b16 %v92
    %v491 = vunpack.c.l.b16 %v93
    %v492 = vunpack.c.l.b16 %v94
    %v493 = vunpack.c.l.b16 %v95
    %v494 = vunpack.c.l.b16 %v96
    %v495 = vunpack.c.l.b16 %v97
    %v496 = vpack.c.b16 %v491, %v490
    %v497 = vpack.c.b16 %v493, %v492
    %v498 = vpack.c.b16 %v495, %v494
    %vm502 = vcmask 392192
    %v504 = vsel %vm502, %v464, 0
    %v507 = vsel %vm502, %v465, 0
    %v510 = vsel %vm502, %v466, 0
    %v513 = vsel %vm502, %v467, 0
    %v516 = vsel %vm502, %v468, 0
    %v519 = vsel %vm502, %v469, 0
    %v522 = vsel %vm502, %v470, 0
    %v525 = vsel %vm502, %v471, 0
    %v528 = vsel %vm502, %v472, 0
    %v531 = vsel %vm502, %v473, 0
    %v534 = vsel %vm502, %v474, 0
    %v537 = vsel %vm502, %v475, 0
    %v540 = vsel %vm502, %v476, 0
    %v543 = vsel %vm502, %v477, 0
    %v546 = vsel %vm502, %v478, 0
    %v549 = vsel %vm502, %v479, 0
    %551 = vmatprep.subr.bf16.mxu0 0
    %552 = vmatpush1.bf16.msra.mxu0 %v496
    %553 = vmatprep.subr.bf16.mxu0 0
    %554 = vmatpush1.bf16.msra.mxu0 %v497
    %555 = vmatprep.subr.bf16.mxu0 0
    %556 = vmatpush1.bf16.msra.mxu0 %v498
    %557 = vmatprep.subr.bf16.mxu0 0
    %558 = vmatpush1.bf16.msra.mxu0 0
    %559 = vmatprep.subr.bf16.mxu0 0
    %560 = vmatpush1.bf16.msra.mxu0 0
    %561 = vmatprep.subr.bf16.mxu0 0
    %562 = vmatpush1.bf16.msra.mxu0 0
    %563 = vmatprep.subr.bf16.mxu0 0
    %564 = vmatpush1.bf16.msra.mxu0 0
    %565 = vmatprep.subr.bf16.mxu0 0
    %566 = vmatpush1.bf16.msra.mxu0 0
    %567 = vmatprep.subr.bf16.mxu0 0
    %568 = vmatpush1.bf16.msra.mxu0 0
    %569 = vmatprep.subr.bf16.mxu0 0
    %570 = vmatpush1.bf16.msra.mxu0 0
    %571 = vmatprep.subr.bf16.mxu0 0
    %572 = vmatpush1.bf16.msra.mxu0 0
    %573 = vmatprep.subr.bf16.mxu0 0
    %574 = vmatpush1.bf16.msra.mxu0 0
    %575 = vmatprep.subr.bf16.mxu0 0
    %576 = vmatpush1.bf16.msra.mxu0 0
    %577 = vmatprep.subr.bf16.mxu0 0
    %578 = vmatpush1.bf16.msra.mxu0 0
    %579 = vmatprep.subr.bf16.mxu0 0
    %580 = vmatpush1.bf16.msra.mxu0 0
    %581 = vmatprep.subr.bf16.mxu0 0
    %582 = vmatpush1.bf16.msra.mxu0 0
    %583 = vmatprep.mubr.bf16.mxu0 0
    %584 = vmatmul.mubr.bf16.gmra.mrb[0].mxu0 %v504
    %v585 = vpop.f32.mrb[0].mxu0
    %v586 = vadd.f32 %v483, %v585
    %v587 = vpop.f32.mrb[0].mxu0
    %v588 = vpop.f32.mrb[0].mxu0
    %v589 = vadd.f32 %v483, %v588
    %v590 = vpop.f32.mrb[0].mxu0
    %591 = vmatprep.mubr.bf16.mxu0 0
    %592 = vmatmul.mubr.bf16.gmra.mrb[0].mxu0 %v507
    %v593 = vpop.f32.mrb[0].mxu0
    %v594 = vadd.f32 %v483, %v593
    %v595 = vpop.f32.mrb[0].mxu0
    %v596 = vpop.f32.mrb[0].mxu0
    %v597 = vadd.f32 %v483, %v596
    %v598 = vpop.f32.mrb[0].mxu0
    %599 = vmatprep.mubr.bf16.mxu0 0
    %600 = vmatmul.mubr.bf16.gmra.mrb[0].mxu0 %v510
    %v601 = vpop.f32.mrb[0].mxu0
    %v602 = vadd.f32 %v483, %v601
    %v603 = vpop.f32.mrb[0].mxu0
    %v604 = vpop.f32.mrb[0].mxu0
    %v605 = vadd.f32 %v483, %v604
    %v606 = vpop.f32.mrb[0].mxu0
    %607 = vmatprep.mubr.bf16.mxu0 0
    %608 = vmatmul.mubr.bf16.gmra.mrb[0].mxu0 %v513
    %v609 = vpop.f32.mrb[0].mxu0
    %v610 = vadd.f32 %v483, %v609
    %v611 = vpop.f32.mrb[0].mxu0
    %v612 = vpop.f32.mrb[0].mxu0
    %v613 = vadd.f32 %v483, %v612
    %v614 = vpop.f32.mrb[0].mxu0
    %615 = vmatprep.mubr.bf16.mxu0 0
    %616 = vmatmul.mubr.bf16.gmra.mrb[0].mxu0 %v516
    %v617 = vpop.f32.mrb[0].mxu0
    %v618 = vadd.f32 %v483, %v617
    %v619 = vpop.f32.mrb[0].mxu0
    %v620 = vpop.f32.mrb[0].mxu0
    %v621 = vadd.f32 %v483, %v620
    %v622 = vpop.f32.mrb[0].mxu0
    %623 = vmatprep.mubr.bf16.mxu0 0
    %624 = vmatmul.mubr.bf16.gmra.mrb[0].mxu0 %v519
    %v625 = vpop.f32.mrb[0].mxu0
    %v626 = vadd.f32 %v483, %v625
    %v627 = vpop.f32.mrb[0].mxu0
    %v628 = vpop.f32.mrb[0].mxu0
    %v629 = vadd.f32 %v483, %v628
    %v630 = vpop.f32.mrb[0].mxu0
    %631 = vmatprep.mubr.bf16.mxu0 0
    %632 = vmatmul.mubr.bf16.gmra.mrb[0].mxu0 %v522
    %v633 = vpop.f32.mrb[0].mxu0
    %v634 = vadd.f32 %v483, %v633
    %v635 = vpop.f32.mrb[0].mxu0
    %v636 = vpop.f32.mrb[0].mxu0
    %v637 = vadd.f32 %v483, %v636
    %v638 = vpop.f32.mrb[0].mxu0
    %639 = vmatprep.mubr.bf16.mxu0 0
    %640 = vmatmul.mubr.bf16.gmra.mrb[0].mxu0 %v525
    %v641 = vpop.f32.mrb[0].mxu0
    %v642 = vadd.f32 %v483, %v641
    %v643 = vpop.f32.mrb[0].mxu0
    %v644 = vpop.f32.mrb[0].mxu0
    %v645 = vadd.f32 %v483, %v644
    %v646 = vpop.f32.mrb[0].mxu0
    %647 = vmatprep.mubr.bf16.mxu0 0
    %648 = vmatmul.mubr.bf16.gmra.mrb[0].mxu0 %v528
    %v649 = vpop.f32.mrb[0].mxu0
    %v650 = vadd.f32 %v483, %v649
    %v651 = vpop.f32.mrb[0].mxu0
    %v652 = vpop.f32.mrb[0].mxu0
    %v653 = vadd.f32 %v483, %v652
    %v654 = vpop.f32.mrb[0].mxu0
    %655 = vmatprep.mubr.bf16.mxu0 0
    %656 = vmatmul.mubr.bf16.gmra.mrb[0].mxu0 %v531
    %v657 = vpop.f32.mrb[0].mxu0
    %v658 = vadd.f32 %v483, %v657
    %v659 = vpop.f32.mrb[0].mxu0
    %v660 = vpop.f32.mrb[0].mxu0
    %v661 = vadd.f32 %v483, %v660
    %v662 = vpop.f32.mrb[0].mxu0
    %663 = vmatprep.mubr.bf16.mxu0 0
    %664 = vmatmul.mubr.bf16.gmra.mrb[0].mxu0 %v534
    %v665 = vpop.f32.mrb[0].mxu0
    %v666 = vadd.f32 %v483, %v665
    %v667 = vpop.f32.mrb[0].mxu0
    %v668 = vpop.f32.mrb[0].mxu0
    %v669 = vadd.f32 %v483, %v668
    %v670 = vpop.f32.mrb[0].mxu0
    %671 = vmatprep.mubr.bf16.mxu0 0
    %672 = vmatmul.mubr.bf16.gmra.mrb[0].mxu0 %v537
    %v673 = vpop.f32.mrb[0].mxu0
    %v674 = vadd.f32 %v483, %v673
    %v675 = vpop.f32.mrb[0].mxu0
    %v676 = vpop.f32.mrb[0].mxu0
    %v677 = vadd.f32 %v483, %v676
    %v678 = vpop.f32.mrb[0].mxu0
    %679 = vmatprep.mubr.bf16.mxu0 0
    %680 = vmatmul.mubr.bf16.gmra.mrb[0].mxu0 %v540
    %v681 = vpop.f32.mrb[0].mxu0
    %v682 = vadd.f32 %v483, %v681
    %v683 = vpop.f32.mrb[0].mxu0
    %v684 = vpop.f32.mrb[0].mxu0
    %v685 = vadd.f32 %v483, %v684
    %v686 = vpop.f32.mrb[0].mxu0
    %687 = vmatprep.mubr.bf16.mxu0 0
    %688 = vmatmul.mubr.bf16.gmra.mrb[0].mxu0 %v543
    %v689 = vpop.f32.mrb[0].mxu0
    %v690 = vadd.f32 %v483, %v689
    %v691 = vpop.f32.mrb[0].mxu0
    %v692 = vpop.f32.mrb[0].mxu0
    %v693 = vadd.f32 %v483, %v692
    %v694 = vpop.f32.mrb[0].mxu0
    %695 = vmatprep.mubr.bf16.mxu0 0
    %696 = vmatmul.mubr.bf16.gmra.mrb[0].mxu0 %v546
    %v697 = vpop.f32.mrb[0].mxu0
    %v698 = vadd.f32 %v483, %v697
    %v699 = vpop.f32.mrb[0].mxu0
    %v700 = vpop.f32.mrb[0].mxu0
    %v701 = vadd.f32 %v483, %v700
    %v702 = vpop.f32.mrb[0].mxu0
    %703 = vmatprep.mubr.bf16.mxu0 0
    %704 = vmatmul.mubr.bf16.gmra.mrb[0].mxu0 %v549
    %v705 = vpop.f32.mrb[0].mxu0
    %v706 = vadd.f32 %v483, %v705
    %v707 = vpop.f32.mrb[0].mxu0
    %v708 = vpop.f32.mrb[0].mxu0
    %v709 = vadd.f32 %v483, %v708
    %v710 = vpop.f32.mrb[0].mxu0
    %711 = vdwg.mxu0
    %v712 = vmax.f32 %v586, 0.0
    %v713 = vmax.f32 %v589, 0.0
    %v714 = vmax.f32 %v594, 0.0
    %v715 = vmax.f32 %v597, 0.0
    %v716 = vmax.f32 %v602, 0.0
    %v717 = vmax.f32 %v605, 0.0
    %v718 = vmax.f32 %v610, 0.0
    %v719 = vmax.f32 %v613, 0.0
    %v720 = vmax.f32 %v618, 0.0
    %v721 = vmax.f32 %v621, 0.0
    %v722 = vmax.f32 %v626, 0.0
    %v723 = vmax.f32 %v629, 0.0
    %v724 = vmax.f32 %v634, 0.0
    %v725 = vmax.f32 %v637, 0.0
    %v726 = vmax.f32 %v642, 0.0
    %v727 = vmax.f32 %v645, 0.0
    %v728 = vmax.f32 %v650, 0.0
    %v729 = vmax.f32 %v653, 0.0
    %v730 = vmax.f32 %v658, 0.0
    %v731 = vmax.f32 %v661, 0.0
    %v732 = vmax.f32 %v666, 0.0
    %v733 = vmax.f32 %v669, 0.0
    %v734 = vmax.f32 %v674, 0.0
    %v735 = vmax.f32 %v677, 0.0
    %v736 = vmax.f32 %v682, 0.0
    %v737 = vmax.f32 %v685, 0.0
    %v738 = vmax.f32 %v690, 0.0
    %v739 = vmax.f32 %v693, 0.0
    %v740 = vmax.f32 %v698, 0.0
    %v741 = vmax.f32 %v701, 0.0
    %v742 = vmax.f32 %v706, 0.0
    %v743 = vmax.f32 %v709, 0.0
    %v744 = vpack.c.bf16 %v713, %v712
    %v745 = vpack.c.bf16 %v715, %v714
    %v746 = vpack.c.bf16 %v717, %v716
    %v747 = vpack.c.bf16 %v719, %v718
    %v748 = vpack.c.bf16 %v721, %v720
    %v749 = vpack.c.bf16 %v723, %v722
    %v750 = vpack.c.bf16 %v725, %v724
    %v751 = vpack.c.bf16 %v727, %v726
    %v752 = vpack.c.bf16 %v729, %v728
    %v753 = vpack.c.bf16 %v731, %v730
    %v754 = vpack.c.bf16 %v733, %v732
    %v755 = vpack.c.bf16 %v735, %v734
    %v756 = vpack.c.bf16 %v737, %v736
    %v757 = vpack.c.bf16 %v739, %v738
    %v758 = vpack.c.bf16 %v741, %v740
    %v759 = vpack.c.bf16 %v743, %v742
    %v760 = vlaneseq
    %v761 = vshrl.u32 %v760, 7
    %v762 = vsub.s32 2, %v761
    %v763 = vrot.slane %v83, %v762
    %v768 = vunpack.c.l.b16 %v98
    %v769 = vunpack.c.l.b16 %v99
    %v770 = vunpack.c.l.b16 %v100
    %v771 = vunpack.c.l.b16 %v101
    %v772 = vpack.c.b16 %v769, %v768
    %v773 = vpack.c.b16 %v771, %v770
    %vm776 = vcmask 261120
    %v778 = vsel %vm776, %v744, 0
    %v781 = vsel %vm776, %v745, 0
    %v784 = vsel %vm776, %v746, 0
    %v787 = vsel %vm776, %v747, 0
    %v790 = vsel %vm776, %v748, 0
    %v793 = vsel %vm776, %v749, 0
    %v796 = vsel %vm776, %v750, 0
    %v799 = vsel %vm776, %v751, 0
    %v802 = vsel %vm776, %v752, 0
    %v805 = vsel %vm776, %v753, 0
    %v808 = vsel %vm776, %v754, 0
    %v811 = vsel %vm776, %v755, 0
    %v814 = vsel %vm776, %v756, 0
    %v817 = vsel %vm776, %v757, 0
    %v820 = vsel %vm776, %v758, 0
    %v823 = vsel %vm776, %v759, 0
    %825 = vmatprep.subr.bf16.mxu0 0
    %826 = vmatpush1.bf16.msra.mxu0 %v772
    %827 = vmatprep.subr.bf16.mxu0 0
    %828 = vmatpush1.bf16.msra.mxu0 %v773
    %829 = vmatprep.subr.bf16.mxu0 0
    %830 = vmatpush1.bf16.msra.mxu0 0
    %831 = vmatprep.subr.bf16.mxu0 0
    %832 = vmatpush1.bf16.msra.mxu0 0
    %833 = vmatprep.subr.bf16.mxu0 0
    %834 = vmatpush1.bf16.msra.mxu0 0
    %835 = vmatprep.subr.bf16.mxu0 0
    %836 = vmatpush1.bf16.msra.mxu0 0
    %837 = vmatprep.subr.bf16.mxu0 0
    %838 = vmatpush1.bf16.msra.mxu0 0
    %839 = vmatprep.subr.bf16.mxu0 0
    %840 = vmatpush1.bf16.msra.mxu0 0
    %841 = vmatprep.subr.bf16.mxu0 0
    %842 = vmatpush1.bf16.msra.mxu0 0
    %843 = vmatprep.subr.bf16.mxu0 0
    %844 = vmatpush1.bf16.msra.mxu0 0
    %845 = vmatprep.subr.bf16.mxu0 0
    %846 = vmatpush1.bf16.msra.mxu0 0
    %847 = vmatprep.subr.bf16.mxu0 0
    %848 = vmatpush1.bf16.msra.mxu0 0
    %849 = vmatprep.subr.bf16.mxu0 0
    %850 = vmatpush1.bf16.msra.mxu0 0
    %851 = vmatprep.subr.bf16.mxu0 0
    %852 = vmatpush1.bf16.msra.mxu0 0
    %853 = vmatprep.subr.bf16.mxu0 0
    %854 = vmatpush1.bf16.msra.mxu0 0
    %855 = vmatprep.subr.bf16.mxu0 0
    %856 = vmatpush1.bf16.msra.mxu0 0
    %857 = vmatprep.mubr.bf16.mxu0 0
    %858 = vmatmul.mubr.bf16.gmra.mrb[0].mxu0 %v778
    %v859 = vpop.f32.mrb[0].mxu0
    %v860 = vadd.f32 %v763, %v859
    %v861 = vpop.f32.mrb[0].mxu0
    %v862 = vpop.f32.mrb[0].mxu0
    %v863 = vadd.f32 %v763, %v862
    %v864 = vpop.f32.mrb[0].mxu0
    %865 = vmatprep.mubr.bf16.mxu0 0
    %866 = vmatmul.mubr.bf16.gmra.mrb[0].mxu0 %v781
    %v867 = vpop.f32.mrb[0].mxu0
    %v868 = vadd.f32 %v763, %v867
    %v869 = vpop.f32.mrb[0].mxu0
    %v870 = vpop.f32.mrb[0].mxu0
    %v871 = vadd.f32 %v763, %v870
    %v872 = vpop.f32.mrb[0].mxu0
    %873 = vmatprep.mubr.bf16.mxu0 0
    %874 = vmatmul.mubr.bf16.gmra.mrb[0].mxu0 %v784
    %v875 = vpop.f32.mrb[0].mxu0
    %v876 = vadd.f32 %v763, %v875
    %v877 = vpop.f32.mrb[0].mxu0
    %v878 = vpop.f32.mrb[0].mxu0
    %v879 = vadd.f32 %v763, %v878
    %v880 = vpop.f32.mrb[0].mxu0
    %881 = vmatprep.mubr.bf16.mxu0 0
    %882 = vmatmul.mubr.bf16.gmra.mrb[0].mxu0 %v787
    %v883 = vpop.f32.mrb[0].mxu0
    %v884 = vadd.f32 %v763, %v883
    %v885 = vpop.f32.mrb[0].mxu0
    %v886 = vpop.f32.mrb[0].mxu0
    %v887 = vadd.f32 %v763, %v886
    %v888 = vpop.f32.mrb[0].mxu0
    %889 = vmatprep.mubr.bf16.mxu0 0
    %890 = vmatmul.mubr.bf16.gmra.mrb[0].mxu0 %v790
    %v891 = vpop.f32.mrb[0].mxu0
    %v892 = vadd.f32 %v763, %v891
    %v893 = vpop.f32.mrb[0].mxu0
    %v894 = vpop.f32.mrb[0].mxu0
    %v895 = vadd.f32 %v763, %v894
    %v896 = vpop.f32.mrb[0].mxu0
    %897 = vmatprep.mubr.bf16.mxu0 0
    %898 = vmatmul.mubr.bf16.gmra.mrb[0].mxu0 %v793
    %v899 = vpop.f32.mrb[0].mxu0
    %v900 = vadd.f32 %v763, %v899
    %v901 = vpop.f32.mrb[0].mxu0
    %v902 = vpop.f32.mrb[0].mxu0
    %v903 = vadd.f32 %v763, %v902
    %v904 = vpop.f32.mrb[0].mxu0
    %905 = vmatprep.mubr.bf16.mxu0 0
    %906 = vmatmul.mubr.bf16.gmra.mrb[0].mxu0 %v796
    %v907 = vpop.f32.mrb[0].mxu0
    %v908 = vadd.f32 %v763, %v907
    %v909 = vpop.f32.mrb[0].mxu0
    %v910 = vpop.f32.mrb[0].mxu0
    %v911 = vadd.f32 %v763, %v910
    %v912 = vpop.f32.mrb[0].mxu0
    %913 = vmatprep.mubr.bf16.mxu0 0
    %914 = vmatmul.mubr.bf16.gmra.mrb[0].mxu0 %v799
    %v915 = vpop.f32.mrb[0].mxu0
    %v916 = vadd.f32 %v763, %v915
    %v917 = vpop.f32.mrb[0].mxu0
    %v918 = vpop.f32.mrb[0].mxu0
    %v919 = vadd.f32 %v763, %v918
    %v920 = vpop.f32.mrb[0].mxu0
    %921 = vmatprep.mubr.bf16.mxu0 0
    %922 = vmatmul.mubr.bf16.gmra.mrb[0].mxu0 %v802
    %v923 = vpop.f32.mrb[0].mxu0
    %v924 = vadd.f32 %v763, %v923
    %v925 = vpop.f32.mrb[0].mxu0
    %v926 = vpop.f32.mrb[0].mxu0
    %v927 = vadd.f32 %v763, %v926
    %v928 = vpop.f32.mrb[0].mxu0
    %929 = vmatprep.mubr.bf16.mxu0 0
    %930 = vmatmul.mubr.bf16.gmra.mrb[0].mxu0 %v805
    %v931 = vpop.f32.mrb[0].mxu0
    %v932 = vadd.f32 %v763, %v931
    %v933 = vpop.f32.mrb[0].mxu0
    %v934 = vpop.f32.mrb[0].mxu0
    %v935 = vadd.f32 %v763, %v934
    %v936 = vpop.f32.mrb[0].mxu0
    %937 = vmatprep.mubr.bf16.mxu0 0
    %938 = vmatmul.mubr.bf16.gmra.mrb[0].mxu0 %v808
    %v939 = vpop.f32.mrb[0].mxu0
    %v940 = vadd.f32 %v763, %v939
    %v941 = vpop.f32.mrb[0].mxu0
    %v942 = vpop.f32.mrb[0].mxu0
    %v943 = vadd.f32 %v763, %v942
    %v944 = vpop.f32.mrb[0].mxu0
    %945 = vmatprep.mubr.bf16.mxu0 0
    %946 = vmatmul.mubr.bf16.gmra.mrb[0].mxu0 %v811
    %v947 = vpop.f32.mrb[0].mxu0
    %v948 = vadd.f32 %v763, %v947
    %v949 = vpop.f32.mrb[0].mxu0
    %v950 = vpop.f32.mrb[0].mxu0
    %v951 = vadd.f32 %v763, %v950
    %v952 = vpop.f32.mrb[0].mxu0
    %953 = vmatprep.mubr.bf16.mxu0 0
    %954 = vmatmul.mubr.bf16.gmra.mrb[0].mxu0 %v814
    %v955 = vpop.f32.mrb[0].mxu0
    %v956 = vadd.f32 %v763, %v955
    %v957 = vpop.f32.mrb[0].mxu0
    %v958 = vpop.f32.mrb[0].mxu0
    %v959 = vadd.f32 %v763, %v958
    %v960 = vpop.f32.mrb[0].mxu0
    %961 = vmatprep.mubr.bf16.mxu0 0
    %962 = vmatmul.mubr.bf16.gmra.mrb[0].mxu0 %v817
    %v963 = vpop.f32.mrb[0].mxu0
    %v964 = vadd.f32 %v763, %v963
    %v965 = vpop.f32.mrb[0].mxu0
    %v966 = vpop.f32.mrb[0].mxu0
    %v967 = vadd.f32 %v763, %v966
    %v968 = vpop.f32.mrb[0].mxu0
    %969 = vmatprep.mubr.bf16.mxu0 0
    %970 = vmatmul.mubr.bf16.gmra.mrb[0].mxu0 %v820
    %v971 = vpop.f32.mrb[0].mxu0
    %v972 = vadd.f32 %v763, %v971
    %v973 = vpop.f32.mrb[0].mxu0
    %v974 = vpop.f32.mrb[0].mxu0
    %v975 = vadd.f32 %v763, %v974
    %v976 = vpop.f32.mrb[0].mxu0
    %977 = vmatprep.mubr.bf16.mxu0 0
    %978 = vmatmul.mubr.bf16.gmra.mrb[0].mxu0 %v823
    %v979 = vpop.f32.mrb[0].mxu0
    %v980 = vadd.f32 %v763, %v979
    %v981 = vpop.f32.mrb[0].mxu0
    %v982 = vpop.f32.mrb[0].mxu0
    %v983 = vadd.f32 %v763, %v982
    %v984 = vpop.f32.mrb[0].mxu0
    %985 = vdwg.mxu0
    %v986 = vmul.f32 %v860, 0.5
    %v987 = vmul.f32 %v863, 0.5
    %v988 = vmul.f32 %v868, 0.5
    %v989 = vmul.f32 %v871, 0.5
    %v990 = vmul.f32 %v876, 0.5
    %v991 = vmul.f32 %v879, 0.5
    %v992 = vmul.f32 %v884, 0.5
    %v993 = vmul.f32 %v887, 0.5
    %v994 = vmul.f32 %v892, 0.5
    %v995 = vmul.f32 %v895, 0.5
    %v996 = vmul.f32 %v900, 0.5
    %v997 = vmul.f32 %v903, 0.5
    %v998 = vmul.f32 %v908, 0.5
    %v999 = vmul.f32 %v911, 0.5
    %v1000 = vmul.f32 %v916, 0.5
    %v1001 = vmul.f32 %v919, 0.5
    %v1002 = vmul.f32 %v924, 0.5
    %v1003 = vmul.f32 %v927, 0.5
    %v1004 = vmul.f32 %v932, 0.5
    %v1005 = vmul.f32 %v935, 0.5
    %v1006 = vmul.f32 %v940, 0.5
    %v1007 = vmul.f32 %v943, 0.5
    %v1008 = vmul.f32 %v948, 0.5
    %v1009 = vmul.f32 %v951, 0.5
    %v1010 = vmul.f32 %v956, 0.5
    %v1011 = vmul.f32 %v959, 0.5
    %v1012 = vmul.f32 %v964, 0.5
    %v1013 = vmul.f32 %v967, 0.5
    %v1014 = vmul.f32 %v972, 0.5
    %v1015 = vmul.f32 %v975, 0.5
    %v1016 = vmul.f32 %v980, 0.5
    %v1017 = vmul.f32 %v983, 0.5
    %v1018 = vmul.f32 %v986, 1.442695
    %v1019 = vpow.pop %v1018
    %v1020 = vmul.f32 %v987, 1.442695
    %v1021 = vpow.pop %v1020
    %v1022 = vmul.f32 %v988, 1.442695
    %v1023 = vpow.pop %v1022
    %v1024 = vmul.f32 %v989, 1.442695
    %v1025 = vpow.pop %v1024
    %v1026 = vmul.f32 %v990, 1.442695
    %v1027 = vpow.pop %v1026
    %v1028 = vmul.f32 %v991, 1.442695
    %v1029 = vpow.pop %v1028
    %v1030 = vmul.f32 %v992, 1.442695
    %v1031 = vpow.pop %v1030
    %v1032 = vmul.f32 %v993, 1.442695
    %v1033 = vpow.pop %v1032
    %v1034 = vmul.f32 %v994, 1.442695
    %v1035 = vpow.pop %v1034
    %v1036 = vmul.f32 %v995, 1.442695
    %v1037 = vpow.pop %v1036
    %v1038 = vmul.f32 %v996, 1.442695
    %v1039 = vpow.pop %v1038
    %v1040 = vmul.f32 %v997, 1.442695
    %v1041 = vpow.pop %v1040
    %v1042 = vmul.f32 %v998, 1.442695
    %v1043 = vpow.pop %v1042
    %v1044 = vmul.f32 %v999, 1.442695
    %v1045 = vpow.pop %v1044
    %v1046 = vmul.f32 %v1000, 1.442695
    %v1047 = vpow.pop %v1046
    %v1048 = vmul.f32 %v1001, 1.442695
    %v1049 = vpow.pop %v1048
    %v1050 = vmul.f32 %v1002, 1.442695
    %v1051 = vpow.pop %v1050
    %v1052 = vmul.f32 %v1003, 1.442695
    %v1053 = vpow.pop %v1052
    %v1054 = vmul.f32 %v1004, 1.442695
    %v1055 = vpow.pop %v1054
    %v1056 = vmul.f32 %v1005, 1.442695
    %v1057 = vpow.pop %v1056
    %v1058 = vmul.f32 %v1006, 1.442695
    %v1059 = vpow.pop %v1058
    %v1060 = vmul.f32 %v1007, 1.442695
    %v1061 = vpow.pop %v1060
    %v1062 = vmul.f32 %v1008, 1.442695
    %v1063 = vpow.pop %v1062
    %v1064 = vmul.f32 %v1009, 1.442695
    %v1065 = vpow.pop %v1064
    %v1066 = vmul.f32 %v1010, 1.442695
    %v1067 = vpow.pop %v1066
    %v1068 = vmul.f32 %v1011, 1.442695
    %v1069 = vpow.pop %v1068
    %v1070 = vmul.f32 %v1012, 1.442695
    %v1071 = vpow.pop %v1070
    %v1072 = vmul.f32 %v1013, 1.442695
    %v1073 = vpow.pop %v1072
    %v1074 = vmul.f32 %v1014, 1.442695
    %v1075 = vpow.pop %v1074
    %v1076 = vmul.f32 %v1015, 1.442695
    %v1077 = vpow.pop %v1076
    %v1078 = vmul.f32 %v1016, 1.442695
    %v1079 = vpow.pop %v1078
    %v1080 = vmul.f32 %v1017, 1.442695
    %v1081 = vpow.pop %v1080
    %1114 = vrot.lane.b32.xlu0 %v1019, 112
    %v1115 = vpop.permute.xlu0 %1114
    %1116 = vrot.lane.b32.xlu0 %v1021, 112
    %v1117 = vpop.permute.xlu0 %1116
    %1118 = vrot.lane.b32.xlu0 %v1023, 112
    %v1119 = vpop.permute.xlu0 %1118
    %1120 = vrot.lane.b32.xlu0 %v1025, 112
    %v1121 = vpop.permute.xlu0 %1120
    %1122 = vrot.lane.b32.xlu0 %v1027, 112
    %v1123 = vpop.permute.xlu0 %1122
    %1124 = vrot.lane.b32.xlu0 %v1029, 112
    %v1125 = vpop.permute.xlu0 %1124
    %1126 = vrot.lane.b32.xlu0 %v1031, 112
    %v1127 = vpop.permute.xlu0 %1126
    %1128 = vrot.lane.b32.xlu0 %v1033, 112
    %v1129 = vpop.permute.xlu0 %1128
    %1130 = vrot.lane.b32.xlu0 %v1035, 112
    %v1131 = vpop.permute.xlu0 %1130
    %1132 = vrot.lane.b32.xlu0 %v1037, 112
    %v1133 = vpop.permute.xlu0 %1132
    %1134 = vrot.lane.b32.xlu0 %v1039, 112
    %v1135 = vpop.permute.xlu0 %1134
    %1136 = vrot.lane.b32.xlu0 %v1041, 112
    %v1137 = vpop.permute.xlu0 %1136
    %1138 = vrot.lane.b32.xlu0 %v1043, 112
    %v1139 = vpop.permute.xlu0 %1138
    %1140 = vrot.lane.b32.xlu0 %v1045, 112
    %v1141 = vpop.permute.xlu0 %1140
    %1142 = vrot.lane.b32.xlu0 %v1047, 112
    %v1143 = vpop.permute.xlu0 %1142
    %1144 = vrot.lane.b32.xlu0 %v1049, 112
    %v1145 = vpop.permute.xlu0 %1144
    %1146 = vrot.lane.b32.xlu0 %v1051, 112
    %v1147 = vpop.permute.xlu0 %1146
    %1148 = vrot.lane.b32.xlu0 %v1053, 112
    %v1149 = vpop.permute.xlu0 %1148
    %1150 = vrot.lane.b32.xlu0 %v1055, 112
    %v1151 = vpop.permute.xlu0 %1150
    %1152 = vrot.lane.b32.xlu0 %v1057, 112
    %v1153 = vpop.permute.xlu0 %1152
    %1154 = vrot.lane.b32.xlu0 %v1059, 112
    %v1155 = vpop.permute.xlu0 %1154
    %1156 = vrot.lane.b32.xlu0 %v1061, 112
    %v1157 = vpop.permute.xlu0 %1156
    %1158 = vrot.lane.b32.xlu0 %v1063, 112
    %v1159 = vpop.permute.xlu0 %1158
    %1160 = vrot.lane.b32.xlu0 %v1065, 112
    %v1161 = vpop.permute.xlu0 %1160
    %1162 = vrot.lane.b32.xlu0 %v1067, 112
    %v1163 = vpop.permute.xlu0 %1162
    %1164 = vrot.lane.b32.xlu0 %v1069, 112
    %v1165 = vpop.permute.xlu0 %1164
    %1166 = vrot.lane.b32.xlu0 %v1071, 112
    %v1167 = vpop.permute.xlu0 %1166
    %1168 = vrot.lane.b32.xlu0 %v1073, 112
    %v1169 = vpop.permute.xlu0 %1168
    %1170 = vrot.lane.b32.xlu0 %v1075, 112
    %v1171 = vpop.permute.xlu0 %1170
    %1172 = vrot.lane.b32.xlu0 %v1077, 112
    %v1173 = vpop.permute.xlu0 %1172
    %1174 = vrot.lane.b32.xlu0 %v1079, 112
    %v1175 = vpop.permute.xlu0 %1174
    %1176 = vrot.lane.b32.xlu0 %v1081, 112
    %v1177 = vpop.permute.xlu0 %1176
    %v1210 = vmul.f32 %v51, %v1115
    %v1211 = vmul.f32 %v52, %v1117
    %v1212 = vmul.f32 %v53, %v1119
    %v1213 = vmul.f32 %v54, %v1121
    %v1214 = vmul.f32 %v55, %v1123
    %v1215 = vmul.f32 %v56, %v1125
    %v1216 = vmul.f32 %v57, %v1127
    %v1217 = vmul.f32 %v58, %v1129
    %v1218 = vmul.f32 %v59, %v1131
    %v1219 = vmul.f32 %v60, %v1133
    %v1220 = vmul.f32 %v61, %v1135
    %v1221 = vmul.f32 %v62, %v1137
    %v1222 = vmul.f32 %v63, %v1139
    %v1223 = vmul.f32 %v64, %v1141
    %v1224 = vmul.f32 %v65, %v1143
    %v1225 = vmul.f32 %v66, %v1145
    %v1226 = vmul.f32 %v67, %v1147
    %v1227 = vmul.f32 %v68, %v1149
    %v1228 = vmul.f32 %v69, %v1151
    %v1229 = vmul.f32 %v70, %v1153
    %v1230 = vmul.f32 %v71, %v1155
    %v1231 = vmul.f32 %v72, %v1157
    %v1232 = vmul.f32 %v73, %v1159
    %v1233 = vmul.f32 %v74, %v1161
    %v1234 = vmul.f32 %v75, %v1163
    %v1235 = vmul.f32 %v76, %v1165
    %v1236 = vmul.f32 %v77, %v1167
    %v1237 = vmul.f32 %v78, %v1169
    %v1238 = vmul.f32 %v79, %v1171
    %v1239 = vmul.f32 %v80, %v1173
    %v1240 = vmul.f32 %v81, %v1175
    %v1241 = vmul.f32 %v82, %v1177
    %v1242 = vadd.f32 %v1210, %v860
    %v1243 = vadd.f32 %v1211, %v863
    %v1244 = vadd.f32 %v1212, %v868
    %v1245 = vadd.f32 %v1213, %v871
    %v1246 = vadd.f32 %v1214, %v876
    %v1247 = vadd.f32 %v1215, %v879
    %v1248 = vadd.f32 %v1216, %v884
    %v1249 = vadd.f32 %v1217, %v887
    %v1250 = vadd.f32 %v1218, %v892
    %v1251 = vadd.f32 %v1219, %v895
    %v1252 = vadd.f32 %v1220, %v900
    %v1253 = vadd.f32 %v1221, %v903
    %v1254 = vadd.f32 %v1222, %v908
    %v1255 = vadd.f32 %v1223, %v911
    %v1256 = vadd.f32 %v1224, %v916
    %v1257 = vadd.f32 %v1225, %v919
    %v1258 = vadd.f32 %v1226, %v924
    %v1259 = vadd.f32 %v1227, %v927
    %v1260 = vadd.f32 %v1228, %v932
    %v1261 = vadd.f32 %v1229, %v935
    %v1262 = vadd.f32 %v1230, %v940
    %v1263 = vadd.f32 %v1231, %v943
    %v1264 = vadd.f32 %v1232, %v948
    %v1265 = vadd.f32 %v1233, %v951
    %v1266 = vadd.f32 %v1234, %v956
    %v1267 = vadd.f32 %v1235, %v959
    %v1268 = vadd.f32 %v1236, %v964
    %v1269 = vadd.f32 %v1237, %v967
    %v1270 = vadd.f32 %v1238, %v972
    %v1271 = vadd.f32 %v1239, %v975
    %v1272 = vadd.f32 %v1240, %v980
    %v1273 = vadd.f32 %v1241, %v983
    %v1274 = vpack.c.bf16 %v1243, %v1242
    %v1275 = vpack.c.bf16 %v1245, %v1244
    %v1276 = vpack.c.bf16 %v1247, %v1246
    %v1277 = vpack.c.bf16 %v1249, %v1248
    %v1278 = vpack.c.bf16 %v1251, %v1250
    %v1279 = vpack.c.bf16 %v1253, %v1252
    %v1280 = vpack.c.bf16 %v1255, %v1254
    %v1281 = vpack.c.bf16 %v1257, %v1256
    %v1282 = vpack.c.bf16 %v1259, %v1258
    %v1283 = vpack.c.bf16 %v1261, %v1260
    %v1284 = vpack.c.bf16 %v1263, %v1262
    %v1285 = vpack.c.bf16 %v1265, %v1264
    %v1286 = vpack.c.bf16 %v1267, %v1266
    %v1287 = vpack.c.bf16 %v1269, %v1268
    %v1288 = vpack.c.bf16 %v1271, %v1270
    %v1289 = vpack.c.bf16 %v1273, %v1272
    %v1290 = vlaneseq
    %v1291 = vshrl.u32 %v1290, 7
    %v1292 = vsub.s32 3, %v1291
    %v1293 = vrot.slane %v83, %v1292
    %v1296 = vunpack.c.l.b16 %v102
    %v1297 = vunpack.c.l.b16 %v103
    %v1298 = vpack.c.b16 %v1297, %v1296
    %vm1300 = vcmask 130048
    %v1302 = vsel %vm1300, %v1274, 0
    %v1305 = vsel %vm1300, %v1275, 0
    %v1308 = vsel %vm1300, %v1276, 0
    %v1311 = vsel %vm1300, %v1277, 0
    %v1314 = vsel %vm1300, %v1278, 0
    %v1317 = vsel %vm1300, %v1279, 0
    %v1320 = vsel %vm1300, %v1280, 0
    %v1323 = vsel %vm1300, %v1281, 0
    %v1326 = vsel %vm1300, %v1282, 0
    %v1329 = vsel %vm1300, %v1283, 0
    %v1332 = vsel %vm1300, %v1284, 0
    %v1335 = vsel %vm1300, %v1285, 0
    %v1338 = vsel %vm1300, %v1286, 0
    %v1341 = vsel %vm1300, %v1287, 0
    %v1344 = vsel %vm1300, %v1288, 0
    %v1347 = vsel %vm1300, %v1289, 0
    %1349 = vmatprep.subr.bf16.mxu0 0
    %1350 = vmatpush1.bf16.msra.mxu0 %v1298
    %1351 = vmatprep.subr.bf16.mxu0 0
    %1352 = vmatpush1.bf16.msra.mxu0 0
    %1353 = vmatprep.subr.bf16.mxu0 0
    %1354 = vmatpush1.bf16.msra.mxu0 0
    %1355 = vmatprep.subr.bf16.mxu0 0
    %1356 = vmatpush1.bf16.msra.mxu0 0
    %1357 = vmatprep.subr.bf16.mxu0 0
    %1358 = vmatpush1.bf16.msra.mxu0 0
    %1359 = vmatprep.subr.bf16.mxu0 0
    %1360 = vmatpush1.bf16.msra.mxu0 0
    %1361 = vmatprep.subr.bf16.mxu0 0
    %1362 = vmatpush1.bf16.msra.mxu0 0
    %1363 = vmatprep.subr.bf16.mxu0 0
    %1364 = vmatpush1.bf16.msra.mxu0 0
    %1365 = vmatprep.subr.bf16.mxu0 0
    %1366 = vmatpush1.bf16.msra.mxu0 0
    %1367 = vmatprep.subr.bf16.mxu0 0
    %1368 = vmatpush1.bf16.msra.mxu0 0
    %1369 = vmatprep.subr.bf16.mxu0 0
    %1370 = vmatpush1.bf16.msra.mxu0 0
    %1371 = vmatprep.subr.bf16.mxu0 0
    %1372 = vmatpush1.bf16.msra.mxu0 0
    %1373 = vmatprep.subr.bf16.mxu0 0
    %1374 = vmatpush1.bf16.msra.mxu0 0
    %1375 = vmatprep.subr.bf16.mxu0 0
    %1376 = vmatpush1.bf16.msra.mxu0 0
    %1377 = vmatprep.subr.bf16.mxu0 0
    %1378 = vmatpush1.bf16.msra.mxu0 0
    %1379 = vmatprep.subr.bf16.mxu0 0
    %1380 = vmatpush1.bf16.msra.mxu0 0
    %1381 = vmatprep.mubr.bf16.mxu0 0
    %1382 = vmatmul.mubr.bf16.gmra.mrb[0].mxu0 %v1302
    %v1383 = vpop.f32.mrb[0].mxu0
    %v1384 = vadd.f32 %v1293, %v1383
    %v1385 = vpop.f32.mrb[0].mxu0
    %v1386 = vpop.f32.mrb[0].mxu0
    %v1387 = vadd.f32 %v1293, %v1386
    %v1388 = vpop.f32.mrb[0].mxu0
    %1389 = vmatprep.mubr.bf16.mxu0 0
    %1390 = vmatmul.mubr.bf16.gmra.mrb[0].mxu0 %v1305
    %v1391 = vpop.f32.mrb[0].mxu0
    %v1392 = vadd.f32 %v1293, %v1391
    %v1393 = vpop.f32.mrb[0].mxu0
    %v1394 = vpop.f32.mrb[0].mxu0
    %v1395 = vadd.f32 %v1293, %v1394
    %v1396 = vpop.f32.mrb[0].mxu0
    %1397 = vmatprep.mubr.bf16.mxu0 0
    %1398 = vmatmul.mubr.bf16.gmra.mrb[0].mxu0 %v1308
    %v1399 = vpop.f32.mrb[0].mxu0
    %v1400 = vadd.f32 %v1293, %v1399
    %v1401 = vpop.f32.mrb[0].mxu0
    %v1402 = vpop.f32.mrb[0].mxu0
    %v1403 = vadd.f32 %v1293, %v1402
    %v1404 = vpop.f32.mrb[0].mxu0
    %1405 = vmatprep.mubr.bf16.mxu0 0
    %1406 = vmatmul.mubr.bf16.gmra.mrb[0].mxu0 %v1311
    %v1407 = vpop.f32.mrb[0].mxu0
    %v1408 = vadd.f32 %v1293, %v1407
    %v1409 = vpop.f32.mrb[0].mxu0
    %v1410 = vpop.f32.mrb[0].mxu0
    %v1411 = vadd.f32 %v1293, %v1410
    %v1412 = vpop.f32.mrb[0].mxu0
    %1413 = vmatprep.mubr.bf16.mxu0 0
    %1414 = vmatmul.mubr.bf16.gmra.mrb[0].mxu0 %v1314
    %v1415 = vpop.f32.mrb[0].mxu0
    %v1416 = vadd.f32 %v1293, %v1415
    %v1417 = vpop.f32.mrb[0].mxu0
    %v1418 = vpop.f32.mrb[0].mxu0
    %v1419 = vadd.f32 %v1293, %v1418
    %v1420 = vpop.f32.mrb[0].mxu0
    %1421 = vmatprep.mubr.bf16.mxu0 0
    %1422 = vmatmul.mubr.bf16.gmra.mrb[0].mxu0 %v1317
    %v1423 = vpop.f32.mrb[0].mxu0
    %v1424 = vadd.f32 %v1293, %v1423
    %v1425 = vpop.f32.mrb[0].mxu0
    %v1426 = vpop.f32.mrb[0].mxu0
    %v1427 = vadd.f32 %v1293, %v1426
    %v1428 = vpop.f32.mrb[0].mxu0
    %1429 = vmatprep.mubr.bf16.mxu0 0
    %1430 = vmatmul.mubr.bf16.gmra.mrb[0].mxu0 %v1320
    %v1431 = vpop.f32.mrb[0].mxu0
    %v1432 = vadd.f32 %v1293, %v1431
    %v1433 = vpop.f32.mrb[0].mxu0
    %v1434 = vpop.f32.mrb[0].mxu0
    %v1435 = vadd.f32 %v1293, %v1434
    %v1436 = vpop.f32.mrb[0].mxu0
    %1437 = vmatprep.mubr.bf16.mxu0 0
    %1438 = vmatmul.mubr.bf16.gmra.mrb[0].mxu0 %v1323
    %v1439 = vpop.f32.mrb[0].mxu0
    %v1440 = vadd.f32 %v1293, %v1439
    %v1441 = vpop.f32.mrb[0].mxu0
    %v1442 = vpop.f32.mrb[0].mxu0
    %v1443 = vadd.f32 %v1293, %v1442
    %v1444 = vpop.f32.mrb[0].mxu0
    %1445 = vmatprep.mubr.bf16.mxu0 0
    %1446 = vmatmul.mubr.bf16.gmra.mrb[0].mxu0 %v1326
    %v1447 = vpop.f32.mrb[0].mxu0
    %v1448 = vadd.f32 %v1293, %v1447
    %v1449 = vpop.f32.mrb[0].mxu0
    %v1450 = vpop.f32.mrb[0].mxu0
    %v1451 = vadd.f32 %v1293, %v1450
    %v1452 = vpop.f32.mrb[0].mxu0
    %1453 = vmatprep.mubr.bf16.mxu0 0
    %1454 = vmatmul.mubr.bf16.gmra.mrb[0].mxu0 %v1329
    %v1455 = vpop.f32.mrb[0].mxu0
    %v1456 = vadd.f32 %v1293, %v1455
    %v1457 = vpop.f32.mrb[0].mxu0
    %v1458 = vpop.f32.mrb[0].mxu0
    %v1459 = vadd.f32 %v1293, %v1458
    %v1460 = vpop.f32.mrb[0].mxu0
    %1461 = vmatprep.mubr.bf16.mxu0 0
    %1462 = vmatmul.mubr.bf16.gmra.mrb[0].mxu0 %v1332
    %v1463 = vpop.f32.mrb[0].mxu0
    %v1464 = vadd.f32 %v1293, %v1463
    %v1465 = vpop.f32.mrb[0].mxu0
    %v1466 = vpop.f32.mrb[0].mxu0
    %v1467 = vadd.f32 %v1293, %v1466
    %v1468 = vpop.f32.mrb[0].mxu0
    %1469 = vmatprep.mubr.bf16.mxu0 0
    %1470 = vmatmul.mubr.bf16.gmra.mrb[0].mxu0 %v1335
    %v1471 = vpop.f32.mrb[0].mxu0
    %v1472 = vadd.f32 %v1293, %v1471
    %v1473 = vpop.f32.mrb[0].mxu0
    %v1474 = vpop.f32.mrb[0].mxu0
    %v1475 = vadd.f32 %v1293, %v1474
    %v1476 = vpop.f32.mrb[0].mxu0
    %1477 = vmatprep.mubr.bf16.mxu0 0
    %1478 = vmatmul.mubr.bf16.gmra.mrb[0].mxu0 %v1338
    %v1479 = vpop.f32.mrb[0].mxu0
    %v1480 = vadd.f32 %v1293, %v1479
    %v1481 = vpop.f32.mrb[0].mxu0
    %v1482 = vpop.f32.mrb[0].mxu0
    %v1483 = vadd.f32 %v1293, %v1482
    %v1484 = vpop.f32.mrb[0].mxu0
    %1485 = vmatprep.mubr.bf16.mxu0 0
    %1486 = vmatmul.mubr.bf16.gmra.mrb[0].mxu0 %v1341
    %v1487 = vpop.f32.mrb[0].mxu0
    %v1488 = vadd.f32 %v1293, %v1487
    %v1489 = vpop.f32.mrb[0].mxu0
    %v1490 = vpop.f32.mrb[0].mxu0
    %v1491 = vadd.f32 %v1293, %v1490
    %v1492 = vpop.f32.mrb[0].mxu0
    %1493 = vmatprep.mubr.bf16.mxu0 0
    %1494 = vmatmul.mubr.bf16.gmra.mrb[0].mxu0 %v1344
    %v1495 = vpop.f32.mrb[0].mxu0
    %v1496 = vadd.f32 %v1293, %v1495
    %v1497 = vpop.f32.mrb[0].mxu0
    %v1498 = vpop.f32.mrb[0].mxu0
    %v1499 = vadd.f32 %v1293, %v1498
    %v1500 = vpop.f32.mrb[0].mxu0
    %1501 = vmatprep.mubr.bf16.mxu0 0
    %1502 = vmatmul.mubr.bf16.gmra.mrb[0].mxu0 %v1347
    %v1503 = vpop.f32.mrb[0].mxu0
    %v1504 = vadd.f32 %v1293, %v1503
    %v1505 = vpop.f32.mrb[0].mxu0
    %v1506 = vpop.f32.mrb[0].mxu0
    %v1507 = vadd.f32 %v1293, %v1506
    %v1508 = vpop.f32.mrb[0].mxu0
    %1509 = vdwg.mxu0
    %vm1510 = vcmp.gt.f32.partialorder %v1384, 0.0
    %vm1511 = vcmp.gt.f32.partialorder %v1387, 0.0
    %vm1512 = vcmp.gt.f32.partialorder %v1392, 0.0
    %vm1513 = vcmp.gt.f32.partialorder %v1395, 0.0
    %vm1514 = vcmp.gt.f32.partialorder %v1400, 0.0
    %vm1515 = vcmp.gt.f32.partialorder %v1403, 0.0
    %vm1516 = vcmp.gt.f32.partialorder %v1408, 0.0
    %vm1517 = vcmp.gt.f32.partialorder %v1411, 0.0
    %vm1518 = vcmp.gt.f32.partialorder %v1416, 0.0
    %vm1519 = vcmp.gt.f32.partialorder %v1419, 0.0
    %vm1520 = vcmp.gt.f32.partialorder %v1424, 0.0
    %vm1521 = vcmp.gt.f32.partialorder %v1427, 0.0
    %vm1522 = vcmp.gt.f32.partialorder %v1432, 0.0
    %vm1523 = vcmp.gt.f32.partialorder %v1435, 0.0
    %vm1524 = vcmp.gt.f32.partialorder %v1440, 0.0
    %vm1525 = vcmp.gt.f32.partialorder %v1443, 0.0
    %vm1526 = vcmp.gt.f32.partialorder %v1448, 0.0
    %vm1527 = vcmp.gt.f32.partialorder %v1451, 0.0
    %vm1528 = vcmp.gt.f32.partialorder %v1456, 0.0
    %vm1529 = vcmp.gt.f32.partialorder %v1459, 0.0
    %vm1530 = vcmp.gt.f32.partialorder %v1464, 0.0
    %vm1531 = vcmp.gt.f32.partialorder %v1467, 0.0
    %vm1532 = vcmp.gt.f32.partialorder %v1472, 0.0
    %vm1533 = vcmp.gt.f32.partialorder %v1475, 0.0
    %vm1534 = vcmp.gt.f32.partialorder %v1480, 0.0
    %vm1535 = vcmp.gt.f32.partialorder %v1483, 0.0
    %vm1536 = vcmp.gt.f32.partialorder %v1488, 0.0
    %vm1537 = vcmp.gt.f32.partialorder %v1491, 0.0
    %vm1538 = vcmp.gt.f32.partialorder %v1496, 0.0
    %vm1539 = vcmp.gt.f32.partialorder %v1499, 0.0
    %vm1540 = vcmp.gt.f32.partialorder %v1504, 0.0
    %vm1541 = vcmp.gt.f32.partialorder %v1507, 0.0
    %v1542 = vmin.f32 %v1384, 0.0
    %v1543 = vmin.f32 %v1387, 0.0
    %v1544 = vmin.f32 %v1392, 0.0
    %v1545 = vmin.f32 %v1395, 0.0
    %v1546 = vmin.f32 %v1400, 0.0
    %v1547 = vmin.f32 %v1403, 0.0
    %v1548 = vmin.f32 %v1408, 0.0
    %v1549 = vmin.f32 %v1411, 0.0
    %v1550 = vmin.f32 %v1416, 0.0
    %v1551 = vmin.f32 %v1419, 0.0
    %v1552 = vmin.f32 %v1424, 0.0
    %v1553 = vmin.f32 %v1427, 0.0
    %v1554 = vmin.f32 %v1432, 0.0
    %v1555 = vmin.f32 %v1435, 0.0
    %v1556 = vmin.f32 %v1440, 0.0
    %v1557 = vmin.f32 %v1443, 0.0
    %v1558 = vmin.f32 %v1448, 0.0
    %v1559 = vmin.f32 %v1451, 0.0
    %v1560 = vmin.f32 %v1456, 0.0
    %v1561 = vmin.f32 %v1459, 0.0
    %v1562 = vmin.f32 %v1464, 0.0
    %v1563 = vmin.f32 %v1467, 0.0
    %v1564 = vmin.f32 %v1472, 0.0
    %v1565 = vmin.f32 %v1475, 0.0
    %v1566 = vmin.f32 %v1480, 0.0
    %v1567 = vmin.f32 %v1483, 0.0
    %v1568 = vmin.f32 %v1488, 0.0
    %v1569 = vmin.f32 %v1491, 0.0
    %v1570 = vmin.f32 %v1496, 0.0
    %v1571 = vmin.f32 %v1499, 0.0
    %v1572 = vmin.f32 %v1504, 0.0
    %v1573 = vmin.f32 %v1507, 0.0
    %v1574 = vmul.f32 %v1542, 1.442695
    %v1575 = vpow.pop %v1574
    %v1576 = vmul.f32 %v1543, 1.442695
    %v1577 = vpow.pop %v1576
    %v1578 = vmul.f32 %v1544, 1.442695
    %v1579 = vpow.pop %v1578
    %v1580 = vmul.f32 %v1545, 1.442695
    %v1581 = vpow.pop %v1580
    %v1582 = vmul.f32 %v1546, 1.442695
    %v1583 = vpow.pop %v1582
    %v1584 = vmul.f32 %v1547, 1.442695
    %v1585 = vpow.pop %v1584
    %v1586 = vmul.f32 %v1548, 1.442695
    %v1587 = vpow.pop %v1586
    %v1588 = vmul.f32 %v1549, 1.442695
    %v1589 = vpow.pop %v1588
    %v1590 = vmul.f32 %v1550, 1.442695
    %v1591 = vpow.pop %v1590
    %v1592 = vmul.f32 %v1551, 1.442695
    %v1593 = vpow.pop %v1592
    %v1594 = vmul.f32 %v1552, 1.442695
    %v1595 = vpow.pop %v1594
    %v1596 = vmul.f32 %v1553, 1.442695
    %v1597 = vpow.pop %v1596
    %v1598 = vmul.f32 %v1554, 1.442695
    %v1599 = vpow.pop %v1598
    %v1600 = vmul.f32 %v1555, 1.442695
    %v1601 = vpow.pop %v1600
    %v1602 = vmul.f32 %v1556, 1.442695
    %v1603 = vpow.pop %v1602
    %v1604 = vmul.f32 %v1557, 1.442695
    %v1605 = vpow.pop %v1604
    %v1606 = vmul.f32 %v1558, 1.442695
    %v1607 = vpow.pop %v1606
    %v1608 = vmul.f32 %v1559, 1.442695
    %v1609 = vpow.pop %v1608
    %v1610 = vmul.f32 %v1560, 1.442695
    %v1611 = vpow.pop %v1610
    %v1612 = vmul.f32 %v1561, 1.442695
    %v1613 = vpow.pop %v1612
    %v1614 = vmul.f32 %v1562, 1.442695
    %v1615 = vpow.pop %v1614
    %v1616 = vmul.f32 %v1563, 1.442695
    %v1617 = vpow.pop %v1616
    %v1618 = vmul.f32 %v1564, 1.442695
    %v1619 = vpow.pop %v1618
    %v1620 = vmul.f32 %v1565, 1.442695
    %v1621 = vpow.pop %v1620
    %v1622 = vmul.f32 %v1566, 1.442695
    %v1623 = vpow.pop %v1622
    %v1624 = vmul.f32 %v1567, 1.442695
    %v1625 = vpow.pop %v1624
    %v1626 = vmul.f32 %v1568, 1.442695
    %v1627 = vpow.pop %v1626
    %v1628 = vmul.f32 %v1569, 1.442695
    %v1629 = vpow.pop %v1628
    %v1630 = vmul.f32 %v1570, 1.442695
    %v1631 = vpow.pop %v1630
    %v1632 = vmul.f32 %v1571, 1.442695
    %v1633 = vpow.pop %v1632
    %v1634 = vmul.f32 %v1572, 1.442695
    %v1635 = vpow.pop %v1634
    %v1636 = vmul.f32 %v1573, 1.442695
    %v1637 = vpow.pop %v1636
    %v1638 = vsub.f32 %v1575, 1.0
    %v1639 = vsub.f32 %v1577, 1.0
    %v1640 = vsub.f32 %v1579, 1.0
    %v1641 = vsub.f32 %v1581, 1.0
    %v1642 = vsub.f32 %v1583, 1.0
    %v1643 = vsub.f32 %v1585, 1.0
    %v1644 = vsub.f32 %v1587, 1.0
    %v1645 = vsub.f32 %v1589, 1.0
    %v1646 = vsub.f32 %v1591, 1.0
    %v1647 = vsub.f32 %v1593, 1.0
    %v1648 = vsub.f32 %v1595, 1.0
    %v1649 = vsub.f32 %v1597, 1.0
    %v1650 = vsub.f32 %v1599, 1.0
    %v1651 = vsub.f32 %v1601, 1.0
    %v1652 = vsub.f32 %v1603, 1.0
    %v1653 = vsub.f32 %v1605, 1.0
    %v1654 = vsub.f32 %v1607, 1.0
    %v1655 = vsub.f32 %v1609, 1.0
    %v1656 = vsub.f32 %v1611, 1.0
    %v1657 = vsub.f32 %v1613, 1.0
    %v1658 = vsub.f32 %v1615, 1.0
    %v1659 = vsub.f32 %v1617, 1.0
    %v1660 = vsub.f32 %v1619, 1.0
    %v1661 = vsub.f32 %v1621, 1.0
    %v1662 = vsub.f32 %v1623, 1.0
    %v1663 = vsub.f32 %v1625, 1.0
    %v1664 = vsub.f32 %v1627, 1.0
    %v1665 = vsub.f32 %v1629, 1.0
    %v1666 = vsub.f32 %v1631, 1.0
    %v1667 = vsub.f32 %v1633, 1.0
    %v1668 = vsub.f32 %v1635, 1.0
    %v1669 = vsub.f32 %v1637, 1.0
    %v1670 = vsel %vm1510, %v1384, %v1638
    %v1671 = vsel %vm1511, %v1387, %v1639
    %v1672 = vsel %vm1512, %v1392, %v1640
    %v1673 = vsel %vm1513, %v1395, %v1641
    %v1674 = vsel %vm1514, %v1400, %v1642
    %v1675 = vsel %vm1515, %v1403, %v1643
    %v1676 = vsel %vm1516, %v1408, %v1644
    %v1677 = vsel %vm1517, %v1411, %v1645
    %v1678 = vsel %vm1518, %v1416, %v1646
    %v1679 = vsel %vm1519, %v1419, %v1647
    %v1680 = vsel %vm1520, %v1424, %v1648
    %v1681 = vsel %vm1521, %v1427, %v1649
    %v1682 = vsel %vm1522, %v1432, %v1650
    %v1683 = vsel %vm1523, %v1435, %v1651
    %v1684 = vsel %vm1524, %v1440, %v1652
    %v1685 = vsel %vm1525, %v1443, %v1653
    %v1686 = vsel %vm1526, %v1448, %v1654
    %v1687 = vsel %vm1527, %v1451, %v1655
    %v1688 = vsel %vm1528, %v1456, %v1656
    %v1689 = vsel %vm1529, %v1459, %v1657
    %v1690 = vsel %vm1530, %v1464, %v1658
    %v1691 = vsel %vm1531, %v1467, %v1659
    %v1692 = vsel %vm1532, %v1472, %v1660
    %v1693 = vsel %vm1533, %v1475, %v1661
    %v1694 = vsel %vm1534, %v1480, %v1662
    %v1695 = vsel %vm1535, %v1483, %v1663
    %v1696 = vsel %vm1536, %v1488, %v1664
    %v1697 = vsel %vm1537, %v1491, %v1665
    %v1698 = vsel %vm1538, %v1496, %v1666
    %v1699 = vsel %vm1539, %v1499, %v1667
    %v1700 = vsel %vm1540, %v1504, %v1668
    %v1701 = vsel %vm1541, %v1507, %v1669
    %v1702 = vpack.c.bf16 %v1671, %v1670
    %v1703 = vpack.c.bf16 %v1673, %v1672
    %v1704 = vpack.c.bf16 %v1675, %v1674
    %v1705 = vpack.c.bf16 %v1677, %v1676
    %v1706 = vpack.c.bf16 %v1679, %v1678
    %v1707 = vpack.c.bf16 %v1681, %v1680
    %v1708 = vpack.c.bf16 %v1683, %v1682
    %v1709 = vpack.c.bf16 %v1685, %v1684
    %v1710 = vpack.c.bf16 %v1687, %v1686
    %v1711 = vpack.c.bf16 %v1689, %v1688
    %v1712 = vpack.c.bf16 %v1691, %v1690
    %v1713 = vpack.c.bf16 %v1693, %v1692
    %v1714 = vpack.c.bf16 %v1695, %v1694
    %v1715 = vpack.c.bf16 %v1697, %v1696
    %v1716 = vpack.c.bf16 %v1699, %v1698
    %v1717 = vpack.c.bf16 %v1701, %v1700
    %v1718 = vlaneseq
    %v1719 = vshrl.u32 %v1718, 7
    %v1720 = vsub.s32 4, %v1719
    %v1721 = vrot.slane %v83, %v1720
    %v1726 = vunpack.c.l.b16 %v104
    %v1727 = vunpack.c.l.b16 %v105
    %v1728 = vunpack.c.l.b16 %v106
    %v1729 = vunpack.c.l.b16 %v107
    %v1730 = vpack.c.b16 %v1727, %v1726
    %v1731 = vpack.c.b16 %v1729, %v1728
    %v1735 = vsel %vm776, %v1702, 0
    %v1738 = vsel %vm776, %v1703, 0
    %v1741 = vsel %vm776, %v1704, 0
    %v1744 = vsel %vm776, %v1705, 0
    %v1747 = vsel %vm776, %v1706, 0
    %v1750 = vsel %vm776, %v1707, 0
    %v1753 = vsel %vm776, %v1708, 0
    %v1756 = vsel %vm776, %v1709, 0
    %v1759 = vsel %vm776, %v1710, 0
    %v1762 = vsel %vm776, %v1711, 0
    %v1765 = vsel %vm776, %v1712, 0
    %v1768 = vsel %vm776, %v1713, 0
    %v1771 = vsel %vm776, %v1714, 0
    %v1774 = vsel %vm776, %v1715, 0
    %v1777 = vsel %vm776, %v1716, 0
    %v1780 = vsel %vm776, %v1717, 0
    %1782 = vmatprep.subr.bf16.mxu0 0
    %1783 = vmatpush1.bf16.msra.mxu0 %v1730
    %1784 = vmatprep.subr.bf16.mxu0 0
    %1785 = vmatpush1.bf16.msra.mxu0 %v1731
    %1786 = vmatprep.subr.bf16.mxu0 0
    %1787 = vmatpush1.bf16.msra.mxu0 0
    %1788 = vmatprep.subr.bf16.mxu0 0
    %1789 = vmatpush1.bf16.msra.mxu0 0
    %1790 = vmatprep.subr.bf16.mxu0 0
    %1791 = vmatpush1.bf16.msra.mxu0 0
    %1792 = vmatprep.subr.bf16.mxu0 0
    %1793 = vmatpush1.bf16.msra.mxu0 0
    %1794 = vmatprep.subr.bf16.mxu0 0
    %1795 = vmatpush1.bf16.msra.mxu0 0
    %1796 = vmatprep.subr.bf16.mxu0 0
    %1797 = vmatpush1.bf16.msra.mxu0 0
    %1798 = vmatprep.subr.bf16.mxu0 0
    %1799 = vmatpush1.bf16.msra.mxu0 0
    %1800 = vmatprep.subr.bf16.mxu0 0
    %1801 = vmatpush1.bf16.msra.mxu0 0
    %1802 = vmatprep.subr.bf16.mxu0 0
    %1803 = vmatpush1.bf16.msra.mxu0 0
    %1804 = vmatprep.subr.bf16.mxu0 0
    %1805 = vmatpush1.bf16.msra.mxu0 0
    %1806 = vmatprep.subr.bf16.mxu0 0
    %1807 = vmatpush1.bf16.msra.mxu0 0
    %1808 = vmatprep.subr.bf16.mxu0 0
    %1809 = vmatpush1.bf16.msra.mxu0 0
    %1810 = vmatprep.subr.bf16.mxu0 0
    %1811 = vmatpush1.bf16.msra.mxu0 0
    %1812 = vmatprep.subr.bf16.mxu0 0
    %1813 = vmatpush1.bf16.msra.mxu0 0
    %1814 = vmatprep.mubr.bf16.mxu0 0
    %1815 = vmatmul.mubr.bf16.gmra.mrb[0].mxu0 %v1735
    %v1816 = vpop.f32.mrb[0].mxu0
    %v1817 = vadd.f32 %v1721, %v1816
    %v1818 = vpop.f32.mrb[0].mxu0
    %v1819 = vpop.f32.mrb[0].mxu0
    %v1820 = vadd.f32 %v1721, %v1819
    %v1821 = vpop.f32.mrb[0].mxu0
    %1822 = vmatprep.mubr.bf16.mxu0 0
    %1823 = vmatmul.mubr.bf16.gmra.mrb[0].mxu0 %v1738
    %v1824 = vpop.f32.mrb[0].mxu0
    %v1825 = vadd.f32 %v1721, %v1824
    %v1826 = vpop.f32.mrb[0].mxu0
    %v1827 = vpop.f32.mrb[0].mxu0
    %v1828 = vadd.f32 %v1721, %v1827
    %v1829 = vpop.f32.mrb[0].mxu0
    %1830 = vmatprep.mubr.bf16.mxu0 0
    %1831 = vmatmul.mubr.bf16.gmra.mrb[0].mxu0 %v1741
    %v1832 = vpop.f32.mrb[0].mxu0
    %v1833 = vadd.f32 %v1721, %v1832
    %v1834 = vpop.f32.mrb[0].mxu0
    %v1835 = vpop.f32.mrb[0].mxu0
    %v1836 = vadd.f32 %v1721, %v1835
    %v1837 = vpop.f32.mrb[0].mxu0
    %1838 = vmatprep.mubr.bf16.mxu0 0
    %1839 = vmatmul.mubr.bf16.gmra.mrb[0].mxu0 %v1744
    %v1840 = vpop.f32.mrb[0].mxu0
    %v1841 = vadd.f32 %v1721, %v1840
    %v1842 = vpop.f32.mrb[0].mxu0
    %v1843 = vpop.f32.mrb[0].mxu0
    %v1844 = vadd.f32 %v1721, %v1843
    %v1845 = vpop.f32.mrb[0].mxu0
    %1846 = vmatprep.mubr.bf16.mxu0 0
    %1847 = vmatmul.mubr.bf16.gmra.mrb[0].mxu0 %v1747
    %v1848 = vpop.f32.mrb[0].mxu0
    %v1849 = vadd.f32 %v1721, %v1848
    %v1850 = vpop.f32.mrb[0].mxu0
    %v1851 = vpop.f32.mrb[0].mxu0
    %v1852 = vadd.f32 %v1721, %v1851
    %v1853 = vpop.f32.mrb[0].mxu0
    %1854 = vmatprep.mubr.bf16.mxu0 0
    %1855 = vmatmul.mubr.bf16.gmra.mrb[0].mxu0 %v1750
    %v1856 = vpop.f32.mrb[0].mxu0
    %v1857 = vadd.f32 %v1721, %v1856
    %v1858 = vpop.f32.mrb[0].mxu0
    %v1859 = vpop.f32.mrb[0].mxu0
    %v1860 = vadd.f32 %v1721, %v1859
    %v1861 = vpop.f32.mrb[0].mxu0
    %1862 = vmatprep.mubr.bf16.mxu0 0
    %1863 = vmatmul.mubr.bf16.gmra.mrb[0].mxu0 %v1753
    %v1864 = vpop.f32.mrb[0].mxu0
    %v1865 = vadd.f32 %v1721, %v1864
    %v1866 = vpop.f32.mrb[0].mxu0
    %v1867 = vpop.f32.mrb[0].mxu0
    %v1868 = vadd.f32 %v1721, %v1867
    %v1869 = vpop.f32.mrb[0].mxu0
    %1870 = vmatprep.mubr.bf16.mxu0 0
    %1871 = vmatmul.mubr.bf16.gmra.mrb[0].mxu0 %v1756
    %v1872 = vpop.f32.mrb[0].mxu0
    %v1873 = vadd.f32 %v1721, %v1872
    %v1874 = vpop.f32.mrb[0].mxu0
    %v1875 = vpop.f32.mrb[0].mxu0
    %v1876 = vadd.f32 %v1721, %v1875
    %v1877 = vpop.f32.mrb[0].mxu0
    %1878 = vmatprep.mubr.bf16.mxu0 0
    %1879 = vmatmul.mubr.bf16.gmra.mrb[0].mxu0 %v1759
    %v1880 = vpop.f32.mrb[0].mxu0
    %v1881 = vadd.f32 %v1721, %v1880
    %v1882 = vpop.f32.mrb[0].mxu0
    %v1883 = vpop.f32.mrb[0].mxu0
    %v1884 = vadd.f32 %v1721, %v1883
    %v1885 = vpop.f32.mrb[0].mxu0
    %1886 = vmatprep.mubr.bf16.mxu0 0
    %1887 = vmatmul.mubr.bf16.gmra.mrb[0].mxu0 %v1762
    %v1888 = vpop.f32.mrb[0].mxu0
    %v1889 = vadd.f32 %v1721, %v1888
    %v1890 = vpop.f32.mrb[0].mxu0
    %v1891 = vpop.f32.mrb[0].mxu0
    %v1892 = vadd.f32 %v1721, %v1891
    %v1893 = vpop.f32.mrb[0].mxu0
    %1894 = vmatprep.mubr.bf16.mxu0 0
    %1895 = vmatmul.mubr.bf16.gmra.mrb[0].mxu0 %v1765
    %v1896 = vpop.f32.mrb[0].mxu0
    %v1897 = vadd.f32 %v1721, %v1896
    %v1898 = vpop.f32.mrb[0].mxu0
    %v1899 = vpop.f32.mrb[0].mxu0
    %v1900 = vadd.f32 %v1721, %v1899
    %v1901 = vpop.f32.mrb[0].mxu0
    %1902 = vmatprep.mubr.bf16.mxu0 0
    %1903 = vmatmul.mubr.bf16.gmra.mrb[0].mxu0 %v1768
    %v1904 = vpop.f32.mrb[0].mxu0
    %v1905 = vadd.f32 %v1721, %v1904
    %v1906 = vpop.f32.mrb[0].mxu0
    %v1907 = vpop.f32.mrb[0].mxu0
    %v1908 = vadd.f32 %v1721, %v1907
    %v1909 = vpop.f32.mrb[0].mxu0
    %1910 = vmatprep.mubr.bf16.mxu0 0
    %1911 = vmatmul.mubr.bf16.gmra.mrb[0].mxu0 %v1771
    %v1912 = vpop.f32.mrb[0].mxu0
    %v1913 = vadd.f32 %v1721, %v1912
    %v1914 = vpop.f32.mrb[0].mxu0
    %v1915 = vpop.f32.mrb[0].mxu0
    %v1916 = vadd.f32 %v1721, %v1915
    %v1917 = vpop.f32.mrb[0].mxu0
    %1918 = vmatprep.mubr.bf16.mxu0 0
    %1919 = vmatmul.mubr.bf16.gmra.mrb[0].mxu0 %v1774
    %v1920 = vpop.f32.mrb[0].mxu0
    %v1921 = vadd.f32 %v1721, %v1920
    %v1922 = vpop.f32.mrb[0].mxu0
    %v1923 = vpop.f32.mrb[0].mxu0
    %v1924 = vadd.f32 %v1721, %v1923
    %v1925 = vpop.f32.mrb[0].mxu0
    %1926 = vmatprep.mubr.bf16.mxu0 0
    %1927 = vmatmul.mubr.bf16.gmra.mrb[0].mxu0 %v1777
    %v1928 = vpop.f32.mrb[0].mxu0
    %v1929 = vadd.f32 %v1721, %v1928
    %v1930 = vpop.f32.mrb[0].mxu0
    %v1931 = vpop.f32.mrb[0].mxu0
    %v1932 = vadd.f32 %v1721, %v1931
    %v1933 = vpop.f32.mrb[0].mxu0
    %1934 = vmatprep.mubr.bf16.mxu0 0
    %1935 = vmatmul.mubr.bf16.gmra.mrb[0].mxu0 %v1780
    %v1936 = vpop.f32.mrb[0].mxu0
    %v1937 = vadd.f32 %v1721, %v1936
    %v1938 = vpop.f32.mrb[0].mxu0
    %v1939 = vpop.f32.mrb[0].mxu0
    %v1940 = vadd.f32 %v1721, %v1939
    %v1941 = vpop.f32.mrb[0].mxu0
    %1942 = vdwg.mxu0
    %vm1943 = vcmp.gt.f32.partialorder %v1817, 0.0
    %vm1944 = vcmp.gt.f32.partialorder %v1820, 0.0
    %vm1945 = vcmp.gt.f32.partialorder %v1825, 0.0
    %vm1946 = vcmp.gt.f32.partialorder %v1828, 0.0
    %vm1947 = vcmp.gt.f32.partialorder %v1833, 0.0
    %vm1948 = vcmp.gt.f32.partialorder %v1836, 0.0
    %vm1949 = vcmp.gt.f32.partialorder %v1841, 0.0
    %vm1950 = vcmp.gt.f32.partialorder %v1844, 0.0
    %vm1951 = vcmp.gt.f32.partialorder %v1849, 0.0
    %vm1952 = vcmp.gt.f32.partialorder %v1852, 0.0
    %vm1953 = vcmp.gt.f32.partialorder %v1857, 0.0
    %vm1954 = vcmp.gt.f32.partialorder %v1860, 0.0
    %vm1955 = vcmp.gt.f32.partialorder %v1865, 0.0
    %vm1956 = vcmp.gt.f32.partialorder %v1868, 0.0
    %vm1957 = vcmp.gt.f32.partialorder %v1873, 0.0
    %vm1958 = vcmp.gt.f32.partialorder %v1876, 0.0
    %vm1959 = vcmp.gt.f32.partialorder %v1881, 0.0
    %vm1960 = vcmp.gt.f32.partialorder %v1884, 0.0
    %vm1961 = vcmp.gt.f32.partialorder %v1889, 0.0
    %vm1962 = vcmp.gt.f32.partialorder %v1892, 0.0
    %vm1963 = vcmp.gt.f32.partialorder %v1897, 0.0
    %vm1964 = vcmp.gt.f32.partialorder %v1900, 0.0
    %vm1965 = vcmp.gt.f32.partialorder %v1905, 0.0
    %vm1966 = vcmp.gt.f32.partialorder %v1908, 0.0
    %vm1967 = vcmp.gt.f32.partialorder %v1913, 0.0
    %vm1968 = vcmp.gt.f32.partialorder %v1916, 0.0
    %vm1969 = vcmp.gt.f32.partialorder %v1921, 0.0
    %vm1970 = vcmp.gt.f32.partialorder %v1924, 0.0
    %vm1971 = vcmp.gt.f32.partialorder %v1929, 0.0
    %vm1972 = vcmp.gt.f32.partialorder %v1932, 0.0
    %vm1973 = vcmp.gt.f32.partialorder %v1937, 0.0
    %vm1974 = vcmp.gt.f32.partialorder %v1940, 0.0
    %v1975 = vmin.f32 %v1817, 0.0
    %v1976 = vmin.f32 %v1820, 0.0
    %v1977 = vmin.f32 %v1825, 0.0
    %v1978 = vmin.f32 %v1828, 0.0
    %v1979 = vmin.f32 %v1833, 0.0
    %v1980 = vmin.f32 %v1836, 0.0
    %v1981 = vmin.f32 %v1841, 0.0
    %v1982 = vmin.f32 %v1844, 0.0
    %v1983 = vmin.f32 %v1849, 0.0
    %v1984 = vmin.f32 %v1852, 0.0
    %v1985 = vmin.f32 %v1857, 0.0
    %v1986 = vmin.f32 %v1860, 0.0
    %v1987 = vmin.f32 %v1865, 0.0
    %v1988 = vmin.f32 %v1868, 0.0
    %v1989 = vmin.f32 %v1873, 0.0
    %v1990 = vmin.f32 %v1876, 0.0
    %v1991 = vmin.f32 %v1881, 0.0
    %v1992 = vmin.f32 %v1884, 0.0
    %v1993 = vmin.f32 %v1889, 0.0
    %v1994 = vmin.f32 %v1892, 0.0
    %v1995 = vmin.f32 %v1897, 0.0
    %v1996 = vmin.f32 %v1900, 0.0
    %v1997 = vmin.f32 %v1905, 0.0
    %v1998 = vmin.f32 %v1908, 0.0
    %v1999 = vmin.f32 %v1913, 0.0
    %v2000 = vmin.f32 %v1916, 0.0
    %v2001 = vmin.f32 %v1921, 0.0
    %v2002 = vmin.f32 %v1924, 0.0
    %v2003 = vmin.f32 %v1929, 0.0
    %v2004 = vmin.f32 %v1932, 0.0
    %v2005 = vmin.f32 %v1937, 0.0
    %v2006 = vmin.f32 %v1940, 0.0
    %v2007 = vmul.f32 %v1975, 1.442695
    %v2008 = vpow.pop %v2007
    %v2009 = vmul.f32 %v1976, 1.442695
    %v2010 = vpow.pop %v2009
    %v2011 = vmul.f32 %v1977, 1.442695
    %v2012 = vpow.pop %v2011
    %v2013 = vmul.f32 %v1978, 1.442695
    %v2014 = vpow.pop %v2013
    %v2015 = vmul.f32 %v1979, 1.442695
    %v2016 = vpow.pop %v2015
    %v2017 = vmul.f32 %v1980, 1.442695
    %v2018 = vpow.pop %v2017
    %v2019 = vmul.f32 %v1981, 1.442695
    %v2020 = vpow.pop %v2019
    %v2021 = vmul.f32 %v1982, 1.442695
    %v2022 = vpow.pop %v2021
    %v2023 = vmul.f32 %v1983, 1.442695
    %v2024 = vpow.pop %v2023
    %v2025 = vmul.f32 %v1984, 1.442695
    %v2026 = vpow.pop %v2025
    %v2027 = vmul.f32 %v1985, 1.442695
    %v2028 = vpow.pop %v2027
    %v2029 = vmul.f32 %v1986, 1.442695
    %v2030 = vpow.pop %v2029
    %v2031 = vmul.f32 %v1987, 1.442695
    %v2032 = vpow.pop %v2031
    %v2033 = vmul.f32 %v1988, 1.442695
    %v2034 = vpow.pop %v2033
    %v2035 = vmul.f32 %v1989, 1.442695
    %v2036 = vpow.pop %v2035
    %v2037 = vmul.f32 %v1990, 1.442695
    %v2038 = vpow.pop %v2037
    %v2039 = vmul.f32 %v1991, 1.442695
    %v2040 = vpow.pop %v2039
    %v2041 = vmul.f32 %v1992, 1.442695
    %v2042 = vpow.pop %v2041
    %v2043 = vmul.f32 %v1993, 1.442695
    %v2044 = vpow.pop %v2043
    %v2045 = vmul.f32 %v1994, 1.442695
    %v2046 = vpow.pop %v2045
    %v2047 = vmul.f32 %v1995, 1.442695
    %v2048 = vpow.pop %v2047
    %v2049 = vmul.f32 %v1996, 1.442695
    %v2050 = vpow.pop %v2049
    %v2051 = vmul.f32 %v1997, 1.442695
    %v2052 = vpow.pop %v2051
    %v2053 = vmul.f32 %v1998, 1.442695
    %v2054 = vpow.pop %v2053
    %v2055 = vmul.f32 %v1999, 1.442695
    %v2056 = vpow.pop %v2055
    %v2057 = vmul.f32 %v2000, 1.442695
    %v2058 = vpow.pop %v2057
    %v2059 = vmul.f32 %v2001, 1.442695
    %v2060 = vpow.pop %v2059
    %v2061 = vmul.f32 %v2002, 1.442695
    %v2062 = vpow.pop %v2061
    %v2063 = vmul.f32 %v2003, 1.442695
    %v2064 = vpow.pop %v2063
    %v2065 = vmul.f32 %v2004, 1.442695
    %v2066 = vpow.pop %v2065
    %v2067 = vmul.f32 %v2005, 1.442695
    %v2068 = vpow.pop %v2067
    %v2069 = vmul.f32 %v2006, 1.442695
    %v2070 = vpow.pop %v2069
    %v2071 = vsub.f32 %v2008, 1.0
    %v2072 = vsub.f32 %v2010, 1.0
    %v2073 = vsub.f32 %v2012, 1.0
    %v2074 = vsub.f32 %v2014, 1.0
    %v2075 = vsub.f32 %v2016, 1.0
    %v2076 = vsub.f32 %v2018, 1.0
    %v2077 = vsub.f32 %v2020, 1.0
    %v2078 = vsub.f32 %v2022, 1.0
    %v2079 = vsub.f32 %v2024, 1.0
    %v2080 = vsub.f32 %v2026, 1.0
    %v2081 = vsub.f32 %v2028, 1.0
    %v2082 = vsub.f32 %v2030, 1.0
    %v2083 = vsub.f32 %v2032, 1.0
    %v2084 = vsub.f32 %v2034, 1.0
    %v2085 = vsub.f32 %v2036, 1.0
    %v2086 = vsub.f32 %v2038, 1.0
    %v2087 = vsub.f32 %v2040, 1.0
    %v2088 = vsub.f32 %v2042, 1.0
    %v2089 = vsub.f32 %v2044, 1.0
    %v2090 = vsub.f32 %v2046, 1.0
    %v2091 = vsub.f32 %v2048, 1.0
    %v2092 = vsub.f32 %v2050, 1.0
    %v2093 = vsub.f32 %v2052, 1.0
    %v2094 = vsub.f32 %v2054, 1.0
    %v2095 = vsub.f32 %v2056, 1.0
    %v2096 = vsub.f32 %v2058, 1.0
    %v2097 = vsub.f32 %v2060, 1.0
    %v2098 = vsub.f32 %v2062, 1.0
    %v2099 = vsub.f32 %v2064, 1.0
    %v2100 = vsub.f32 %v2066, 1.0
    %v2101 = vsub.f32 %v2068, 1.0
    %v2102 = vsub.f32 %v2070, 1.0
    %v2103 = vsel %vm1943, %v1817, %v2071
    %v2104 = vsel %vm1944, %v1820, %v2072
    %v2105 = vsel %vm1945, %v1825, %v2073
    %v2106 = vsel %vm1946, %v1828, %v2074
    %v2107 = vsel %vm1947, %v1833, %v2075
    %v2108 = vsel %vm1948, %v1836, %v2076
    %v2109 = vsel %vm1949, %v1841, %v2077
    %v2110 = vsel %vm1950, %v1844, %v2078
    %v2111 = vsel %vm1951, %v1849, %v2079
    %v2112 = vsel %vm1952, %v1852, %v2080
    %v2113 = vsel %vm1953, %v1857, %v2081
    %v2114 = vsel %vm1954, %v1860, %v2082
    %v2115 = vsel %vm1955, %v1865, %v2083
    %v2116 = vsel %vm1956, %v1868, %v2084
    %v2117 = vsel %vm1957, %v1873, %v2085
    %v2118 = vsel %vm1958, %v1876, %v2086
    %v2119 = vsel %vm1959, %v1881, %v2087
    %v2120 = vsel %vm1960, %v1884, %v2088
    %v2121 = vsel %vm1961, %v1889, %v2089
    %v2122 = vsel %vm1962, %v1892, %v2090
    %v2123 = vsel %vm1963, %v1897, %v2091
    %v2124 = vsel %vm1964, %v1900, %v2092
    %v2125 = vsel %vm1965, %v1905, %v2093
    %v2126 = vsel %vm1966, %v1908, %v2094
    %v2127 = vsel %vm1967, %v1913, %v2095
    %v2128 = vsel %vm1968, %v1916, %v2096
    %v2129 = vsel %vm1969, %v1921, %v2097
    %v2130 = vsel %vm1970, %v1924, %v2098
    %v2131 = vsel %vm1971, %v1929, %v2099
    %v2132 = vsel %vm1972, %v1932, %v2100
    %v2133 = vsel %vm1973, %v1937, %v2101
    %v2134 = vsel %vm1974, %v1940, %v2102
    %v2135 = vpack.c.bf16 %v2104, %v2103
    %v2136 = vpack.c.bf16 %v2106, %v2105
    %v2137 = vpack.c.bf16 %v2108, %v2107
    %v2138 = vpack.c.bf16 %v2110, %v2109
    %v2139 = vpack.c.bf16 %v2112, %v2111
    %v2140 = vpack.c.bf16 %v2114, %v2113
    %v2141 = vpack.c.bf16 %v2116, %v2115
    %v2142 = vpack.c.bf16 %v2118, %v2117
    %v2143 = vpack.c.bf16 %v2120, %v2119
    %v2144 = vpack.c.bf16 %v2122, %v2121
    %v2145 = vpack.c.bf16 %v2124, %v2123
    %v2146 = vpack.c.bf16 %v2126, %v2125
    %v2147 = vpack.c.bf16 %v2128, %v2127
    %v2148 = vpack.c.bf16 %v2130, %v2129
    %v2149 = vpack.c.bf16 %v2132, %v2131
    %v2150 = vpack.c.bf16 %v2134, %v2133
    %v2151 = vlaneseq
    %v2152 = vshrl.u32 %v2151, 7
    %v2153 = vsub.s32 5, %v2152
    %v2154 = vrot.slane %v83, %v2153
    %v2161 = vunpack.c.l.b16 %v108
    %v2162 = vunpack.c.l.b16 %v109
    %v2163 = vunpack.c.l.b16 %v110
    %v2164 = vunpack.c.l.b16 %v111
    %v2165 = vunpack.c.l.b16 %v112
    %v2166 = vunpack.c.l.b16 %v113
    %v2167 = vpack.c.b16 %v2162, %v2161
    %v2168 = vpack.c.b16 %v2164, %v2163
    %v2169 = vpack.c.b16 %v2166, %v2165
    %v2174 = vsel %vm502, %v2135, 0
    %v2177 = vsel %vm502, %v2136, 0
    %v2180 = vsel %vm502, %v2137, 0
    %v2183 = vsel %vm502, %v2138, 0
    %v2186 = vsel %vm502, %v2139, 0
    %v2189 = vsel %vm502, %v2140, 0
    %v2192 = vsel %vm502, %v2141, 0
    %v2195 = vsel %vm502, %v2142, 0
    %v2198 = vsel %vm502, %v2143, 0
    %v2201 = vsel %vm502, %v2144, 0
    %v2204 = vsel %vm502, %v2145, 0
    %v2207 = vsel %vm502, %v2146, 0
    %v2210 = vsel %vm502, %v2147, 0
    %v2213 = vsel %vm502, %v2148, 0
    %v2216 = vsel %vm502, %v2149, 0
    %v2219 = vsel %vm502, %v2150, 0
    %2221 = vmatprep.subr.bf16.mxu0 0
    %2222 = vmatpush1.bf16.msra.mxu0 %v2167
    %2223 = vmatprep.subr.bf16.mxu0 0
    %2224 = vmatpush1.bf16.msra.mxu0 %v2168
    %2225 = vmatprep.subr.bf16.mxu0 0
    %2226 = vmatpush1.bf16.msra.mxu0 %v2169
    %2227 = vmatprep.subr.bf16.mxu0 0
    %2228 = vmatpush1.bf16.msra.mxu0 0
    %2229 = vmatprep.subr.bf16.mxu0 0
    %2230 = vmatpush1.bf16.msra.mxu0 0
    %2231 = vmatprep.subr.bf16.mxu0 0
    %2232 = vmatpush1.bf16.msra.mxu0 0
    %2233 = vmatprep.subr.bf16.mxu0 0
    %2234 = vmatpush1.bf16.msra.mxu0 0
    %2235 = vmatprep.subr.bf16.mxu0 0
    %2236 = vmatpush1.bf16.msra.mxu0 0
    %2237 = vmatprep.subr.bf16.mxu0 0
    %2238 = vmatpush1.bf16.msra.mxu0 0
    %2239 = vmatprep.subr.bf16.mxu0 0
    %2240 = vmatpush1.bf16.msra.mxu0 0
    %2241 = vmatprep.subr.bf16.mxu0 0
    %2242 = vmatpush1.bf16.msra.mxu0 0
    %2243 = vmatprep.subr.bf16.mxu0 0
    %2244 = vmatpush1.bf16.msra.mxu0 0
    %2245 = vmatprep.subr.bf16.mxu0 0
    %2246 = vmatpush1.bf16.msra.mxu0 0
    %2247 = vmatprep.subr.bf16.mxu0 0
    %2248 = vmatpush1.bf16.msra.mxu0 0
    %2249 = vmatprep.subr.bf16.mxu0 0
    %2250 = vmatpush1.bf16.msra.mxu0 0
    %2251 = vmatprep.subr.bf16.mxu0 0
    %2252 = vmatpush1.bf16.msra.mxu0 0
    %2253 = vmatprep.mubr.bf16.mxu0 0
    %2254 = vmatmul.mubr.bf16.gmra.mrb[0].mxu0 %v2174
    %v2255 = vpop.f32.mrb[0].mxu0
    %v2256 = vadd.f32 %v2154, %v2255
    %v2257 = vpop.f32.mrb[0].mxu0
    %v2258 = vpop.f32.mrb[0].mxu0
    %v2259 = vadd.f32 %v2154, %v2258
    %v2260 = vpop.f32.mrb[0].mxu0
    %2261 = vmatprep.mubr.bf16.mxu0 0
    %2262 = vmatmul.mubr.bf16.gmra.mrb[0].mxu0 %v2177
    %v2263 = vpop.f32.mrb[0].mxu0
    %v2264 = vadd.f32 %v2154, %v2263
    %v2265 = vpop.f32.mrb[0].mxu0
    %v2266 = vpop.f32.mrb[0].mxu0
    %v2267 = vadd.f32 %v2154, %v2266
    %v2268 = vpop.f32.mrb[0].mxu0
    %2269 = vmatprep.mubr.bf16.mxu0 0
    %2270 = vmatmul.mubr.bf16.gmra.mrb[0].mxu0 %v2180
    %v2271 = vpop.f32.mrb[0].mxu0
    %v2272 = vadd.f32 %v2154, %v2271
    %v2273 = vpop.f32.mrb[0].mxu0
    %v2274 = vpop.f32.mrb[0].mxu0
    %v2275 = vadd.f32 %v2154, %v2274
    %v2276 = vpop.f32.mrb[0].mxu0
    %2277 = vmatprep.mubr.bf16.mxu0 0
    %2278 = vmatmul.mubr.bf16.gmra.mrb[0].mxu0 %v2183
    %v2279 = vpop.f32.mrb[0].mxu0
    %v2280 = vadd.f32 %v2154, %v2279
    %v2281 = vpop.f32.mrb[0].mxu0
    %v2282 = vpop.f32.mrb[0].mxu0
    %v2283 = vadd.f32 %v2154, %v2282
    %v2284 = vpop.f32.mrb[0].mxu0
    %2285 = vmatprep.mubr.bf16.mxu0 0
    %2286 = vmatmul.mubr.bf16.gmra.mrb[0].mxu0 %v2186
    %v2287 = vpop.f32.mrb[0].mxu0
    %v2288 = vadd.f32 %v2154, %v2287
    %v2289 = vpop.f32.mrb[0].mxu0
    %v2290 = vpop.f32.mrb[0].mxu0
    %v2291 = vadd.f32 %v2154, %v2290
    %v2292 = vpop.f32.mrb[0].mxu0
    %2293 = vmatprep.mubr.bf16.mxu0 0
    %2294 = vmatmul.mubr.bf16.gmra.mrb[0].mxu0 %v2189
    %v2295 = vpop.f32.mrb[0].mxu0
    %v2296 = vadd.f32 %v2154, %v2295
    %v2297 = vpop.f32.mrb[0].mxu0
    %v2298 = vpop.f32.mrb[0].mxu0
    %v2299 = vadd.f32 %v2154, %v2298
    %v2300 = vpop.f32.mrb[0].mxu0
    %2301 = vmatprep.mubr.bf16.mxu0 0
    %2302 = vmatmul.mubr.bf16.gmra.mrb[0].mxu0 %v2192
    %v2303 = vpop.f32.mrb[0].mxu0
    %v2304 = vadd.f32 %v2154, %v2303
    %v2305 = vpop.f32.mrb[0].mxu0
    %v2306 = vpop.f32.mrb[0].mxu0
    %v2307 = vadd.f32 %v2154, %v2306
    %v2308 = vpop.f32.mrb[0].mxu0
    %2309 = vmatprep.mubr.bf16.mxu0 0
    %2310 = vmatmul.mubr.bf16.gmra.mrb[0].mxu0 %v2195
    %v2311 = vpop.f32.mrb[0].mxu0
    %v2312 = vadd.f32 %v2154, %v2311
    %v2313 = vpop.f32.mrb[0].mxu0
    %v2314 = vpop.f32.mrb[0].mxu0
    %v2315 = vadd.f32 %v2154, %v2314
    %v2316 = vpop.f32.mrb[0].mxu0
    %2317 = vmatprep.mubr.bf16.mxu0 0
    %2318 = vmatmul.mubr.bf16.gmra.mrb[0].mxu0 %v2198
    %v2319 = vpop.f32.mrb[0].mxu0
    %v2320 = vadd.f32 %v2154, %v2319
    %v2321 = vpop.f32.mrb[0].mxu0
    %v2322 = vpop.f32.mrb[0].mxu0
    %v2323 = vadd.f32 %v2154, %v2322
    %v2324 = vpop.f32.mrb[0].mxu0
    %2325 = vmatprep.mubr.bf16.mxu0 0
    %2326 = vmatmul.mubr.bf16.gmra.mrb[0].mxu0 %v2201
    %v2327 = vpop.f32.mrb[0].mxu0
    %v2328 = vadd.f32 %v2154, %v2327
    %v2329 = vpop.f32.mrb[0].mxu0
    %v2330 = vpop.f32.mrb[0].mxu0
    %v2331 = vadd.f32 %v2154, %v2330
    %v2332 = vpop.f32.mrb[0].mxu0
    %2333 = vmatprep.mubr.bf16.mxu0 0
    %2334 = vmatmul.mubr.bf16.gmra.mrb[0].mxu0 %v2204
    %v2335 = vpop.f32.mrb[0].mxu0
    %v2336 = vadd.f32 %v2154, %v2335
    %v2337 = vpop.f32.mrb[0].mxu0
    %v2338 = vpop.f32.mrb[0].mxu0
    %v2339 = vadd.f32 %v2154, %v2338
    %v2340 = vpop.f32.mrb[0].mxu0
    %2341 = vmatprep.mubr.bf16.mxu0 0
    %2342 = vmatmul.mubr.bf16.gmra.mrb[0].mxu0 %v2207
    %v2343 = vpop.f32.mrb[0].mxu0
    %v2344 = vadd.f32 %v2154, %v2343
    %v2345 = vpop.f32.mrb[0].mxu0
    %v2346 = vpop.f32.mrb[0].mxu0
    %v2347 = vadd.f32 %v2154, %v2346
    %v2348 = vpop.f32.mrb[0].mxu0
    %2349 = vmatprep.mubr.bf16.mxu0 0
    %2350 = vmatmul.mubr.bf16.gmra.mrb[0].mxu0 %v2210
    %v2351 = vpop.f32.mrb[0].mxu0
    %v2352 = vadd.f32 %v2154, %v2351
    %v2353 = vpop.f32.mrb[0].mxu0
    %v2354 = vpop.f32.mrb[0].mxu0
    %v2355 = vadd.f32 %v2154, %v2354
    %v2356 = vpop.f32.mrb[0].mxu0
    %2357 = vmatprep.mubr.bf16.mxu0 0
    %2358 = vmatmul.mubr.bf16.gmra.mrb[0].mxu0 %v2213
    %v2359 = vpop.f32.mrb[0].mxu0
    %v2360 = vadd.f32 %v2154, %v2359
    %v2361 = vpop.f32.mrb[0].mxu0
    %v2362 = vpop.f32.mrb[0].mxu0
    %v2363 = vadd.f32 %v2154, %v2362
    %v2364 = vpop.f32.mrb[0].mxu0
    %2365 = vmatprep.mubr.bf16.mxu0 0
    %2366 = vmatmul.mubr.bf16.gmra.mrb[0].mxu0 %v2216
    %v2367 = vpop.f32.mrb[0].mxu0
    %v2368 = vadd.f32 %v2154, %v2367
    %v2369 = vpop.f32.mrb[0].mxu0
    %v2370 = vpop.f32.mrb[0].mxu0
    %v2371 = vadd.f32 %v2154, %v2370
    %v2372 = vpop.f32.mrb[0].mxu0
    %2373 = vmatprep.mubr.bf16.mxu0 0
    %2374 = vmatmul.mubr.bf16.gmra.mrb[0].mxu0 %v2219
    %v2375 = vpop.f32.mrb[0].mxu0
    %v2376 = vadd.f32 %v2154, %v2375
    %v2377 = vpop.f32.mrb[0].mxu0
    %v2378 = vpop.f32.mrb[0].mxu0
    %v2379 = vadd.f32 %v2154, %v2378
    %v2380 = vpop.f32.mrb[0].mxu0
    %2381 = vdwg.mxu0
    %v2382 = vsub.f32 0.0, %v2256
    %v2383 = vsub.f32 0.0, %v2259
    %v2384 = vsub.f32 0.0, %v2264
    %v2385 = vsub.f32 0.0, %v2267
    %v2386 = vsub.f32 0.0, %v2272
    %v2387 = vsub.f32 0.0, %v2275
    %v2388 = vsub.f32 0.0, %v2280
    %v2389 = vsub.f32 0.0, %v2283
    %v2390 = vsub.f32 0.0, %v2288
    %v2391 = vsub.f32 0.0, %v2291
    %v2392 = vsub.f32 0.0, %v2296
    %v2393 = vsub.f32 0.0, %v2299
    %v2394 = vsub.f32 0.0, %v2304
    %v2395 = vsub.f32 0.0, %v2307
    %v2396 = vsub.f32 0.0, %v2312
    %v2397 = vsub.f32 0.0, %v2315
    %v2398 = vsub.f32 0.0, %v2320
    %v2399 = vsub.f32 0.0, %v2323
    %v2400 = vsub.f32 0.0, %v2328
    %v2401 = vsub.f32 0.0, %v2331
    %v2402 = vsub.f32 0.0, %v2336
    %v2403 = vsub.f32 0.0, %v2339
    %v2404 = vsub.f32 0.0, %v2344
    %v2405 = vsub.f32 0.0, %v2347
    %v2406 = vsub.f32 0.0, %v2352
    %v2407 = vsub.f32 0.0, %v2355
    %v2408 = vsub.f32 0.0, %v2360
    %v2409 = vsub.f32 0.0, %v2363
    %v2410 = vsub.f32 0.0, %v2368
    %v2411 = vsub.f32 0.0, %v2371
    %v2412 = vsub.f32 0.0, %v2376
    %v2413 = vsub.f32 0.0, %v2379
    %v2414 = vmul.f32 %v2382, 1.442695
    %v2415 = vpow.pop %v2414
    %v2416 = vmul.f32 %v2383, 1.442695
    %v2417 = vpow.pop %v2416
    %v2418 = vmul.f32 %v2384, 1.442695
    %v2419 = vpow.pop %v2418
    %v2420 = vmul.f32 %v2385, 1.442695
    %v2421 = vpow.pop %v2420
    %v2422 = vmul.f32 %v2386, 1.442695
    %v2423 = vpow.pop %v2422
    %v2424 = vmul.f32 %v2387, 1.442695
    %v2425 = vpow.pop %v2424
    %v2426 = vmul.f32 %v2388, 1.442695
    %v2427 = vpow.pop %v2426
    %v2428 = vmul.f32 %v2389, 1.442695
    %v2429 = vpow.pop %v2428
    %v2430 = vmul.f32 %v2390, 1.442695
    %v2431 = vpow.pop %v2430
    %v2432 = vmul.f32 %v2391, 1.442695
    %v2433 = vpow.pop %v2432
    %v2434 = vmul.f32 %v2392, 1.442695
    %v2435 = vpow.pop %v2434
    %v2436 = vmul.f32 %v2393, 1.442695
    %v2437 = vpow.pop %v2436
    %v2438 = vmul.f32 %v2394, 1.442695
    %v2439 = vpow.pop %v2438
    %v2440 = vmul.f32 %v2395, 1.442695
    %v2441 = vpow.pop %v2440
    %v2442 = vmul.f32 %v2396, 1.442695
    %v2443 = vpow.pop %v2442
    %v2444 = vmul.f32 %v2397, 1.442695
    %v2445 = vpow.pop %v2444
    %v2446 = vmul.f32 %v2398, 1.442695
    %v2447 = vpow.pop %v2446
    %v2448 = vmul.f32 %v2399, 1.442695
    %v2449 = vpow.pop %v2448
    %v2450 = vmul.f32 %v2400, 1.442695
    %v2451 = vpow.pop %v2450
    %v2452 = vmul.f32 %v2401, 1.442695
    %v2453 = vpow.pop %v2452
    %v2454 = vmul.f32 %v2402, 1.442695
    %v2455 = vpow.pop %v2454
    %v2456 = vmul.f32 %v2403, 1.442695
    %v2457 = vpow.pop %v2456
    %v2458 = vmul.f32 %v2404, 1.442695
    %v2459 = vpow.pop %v2458
    %v2460 = vmul.f32 %v2405, 1.442695
    %v2461 = vpow.pop %v2460
    %v2462 = vmul.f32 %v2406, 1.442695
    %v2463 = vpow.pop %v2462
    %v2464 = vmul.f32 %v2407, 1.442695
    %v2465 = vpow.pop %v2464
    %v2466 = vmul.f32 %v2408, 1.442695
    %v2467 = vpow.pop %v2466
    %v2468 = vmul.f32 %v2409, 1.442695
    %v2469 = vpow.pop %v2468
    %v2470 = vmul.f32 %v2410, 1.442695
    %v2471 = vpow.pop %v2470
    %v2472 = vmul.f32 %v2411, 1.442695
    %v2473 = vpow.pop %v2472
    %v2474 = vmul.f32 %v2412, 1.442695
    %v2475 = vpow.pop %v2474
    %v2476 = vmul.f32 %v2413, 1.442695
    %v2477 = vpow.pop %v2476
    %v2478 = vadd.f32 %v2415, 1.0
    %v2479 = vadd.f32 %v2417, 1.0
    %v2480 = vadd.f32 %v2419, 1.0
    %v2481 = vadd.f32 %v2421, 1.0
    %v2482 = vadd.f32 %v2423, 1.0
    %v2483 = vadd.f32 %v2425, 1.0
    %v2484 = vadd.f32 %v2427, 1.0
    %v2485 = vadd.f32 %v2429, 1.0
    %v2486 = vadd.f32 %v2431, 1.0
    %v2487 = vadd.f32 %v2433, 1.0
    %v2488 = vadd.f32 %v2435, 1.0
    %v2489 = vadd.f32 %v2437, 1.0
    %v2490 = vadd.f32 %v2439, 1.0
    %v2491 = vadd.f32 %v2441, 1.0
    %v2492 = vadd.f32 %v2443, 1.0
    %v2493 = vadd.f32 %v2445, 1.0
    %v2494 = vadd.f32 %v2447, 1.0
    %v2495 = vadd.f32 %v2449, 1.0
    %v2496 = vadd.f32 %v2451, 1.0
    %v2497 = vadd.f32 %v2453, 1.0
    %v2498 = vadd.f32 %v2455, 1.0
    %v2499 = vadd.f32 %v2457, 1.0
    %v2500 = vadd.f32 %v2459, 1.0
    %v2501 = vadd.f32 %v2461, 1.0
    %v2502 = vadd.f32 %v2463, 1.0
    %v2503 = vadd.f32 %v2465, 1.0
    %v2504 = vadd.f32 %v2467, 1.0
    %v2505 = vadd.f32 %v2469, 1.0
    %v2506 = vadd.f32 %v2471, 1.0
    %v2507 = vadd.f32 %v2473, 1.0
    %v2508 = vadd.f32 %v2475, 1.0
    %v2509 = vadd.f32 %v2477, 1.0
    %v2510 = vrcp.pop %v2478
    %v2511 = vrcp.pop %v2479
    %v2512 = vrcp.pop %v2480
    %v2513 = vrcp.pop %v2481
    %v2514 = vrcp.pop %v2482
    %v2515 = vrcp.pop %v2483
    %v2516 = vrcp.pop %v2484
    %v2517 = vrcp.pop %v2485
    %v2518 = vrcp.pop %v2486
    %v2519 = vrcp.pop %v2487
    %v2520 = vrcp.pop %v2488
    %v2521 = vrcp.pop %v2489
    %v2522 = vrcp.pop %v2490
    %v2523 = vrcp.pop %v2491
    %v2524 = vrcp.pop %v2492
    %v2525 = vrcp.pop %v2493
    %v2526 = vrcp.pop %v2494
    %v2527 = vrcp.pop %v2495
    %v2528 = vrcp.pop %v2496
    %v2529 = vrcp.pop %v2497
    %v2530 = vrcp.pop %v2498
    %v2531 = vrcp.pop %v2499
    %v2532 = vrcp.pop %v2500
    %v2533 = vrcp.pop %v2501
    %v2534 = vrcp.pop %v2502
    %v2535 = vrcp.pop %v2503
    %v2536 = vrcp.pop %v2504
    %v2537 = vrcp.pop %v2505
    %v2538 = vrcp.pop %v2506
    %v2539 = vrcp.pop %v2507
    %v2540 = vrcp.pop %v2508
    %v2541 = vrcp.pop %v2509
    %2574 = vrot.lane.b32.xlu0 %v860, 64
    %v2575 = vpop.permute.xlu0 %2574
    %2576 = vrot.lane.b32.xlu0 %v863, 64
    %v2577 = vpop.permute.xlu0 %2576
    %2578 = vrot.lane.b32.xlu0 %v868, 64
    %v2579 = vpop.permute.xlu0 %2578
    %2580 = vrot.lane.b32.xlu0 %v871, 64
    %v2581 = vpop.permute.xlu0 %2580
    %2582 = vrot.lane.b32.xlu0 %v876, 64
    %v2583 = vpop.permute.xlu0 %2582
    %2584 = vrot.lane.b32.xlu0 %v879, 64
    %v2585 = vpop.permute.xlu0 %2584
    %2586 = vrot.lane.b32.xlu0 %v884, 64
    %v2587 = vpop.permute.xlu0 %2586
    %2588 = vrot.lane.b32.xlu0 %v887, 64
    %v2589 = vpop.permute.xlu0 %2588
    %2590 = vrot.lane.b32.xlu0 %v892, 64
    %v2591 = vpop.permute.xlu0 %2590
    %2592 = vrot.lane.b32.xlu0 %v895, 64
    %v2593 = vpop.permute.xlu0 %2592
    %2594 = vrot.lane.b32.xlu0 %v900, 64
    %v2595 = vpop.permute.xlu0 %2594
    %2596 = vrot.lane.b32.xlu0 %v903, 64
    %v2597 = vpop.permute.xlu0 %2596
    %2598 = vrot.lane.b32.xlu0 %v908, 64
    %v2599 = vpop.permute.xlu0 %2598
    %2600 = vrot.lane.b32.xlu0 %v911, 64
    %v2601 = vpop.permute.xlu0 %2600
    %2602 = vrot.lane.b32.xlu0 %v916, 64
    %v2603 = vpop.permute.xlu0 %2602
    %2604 = vrot.lane.b32.xlu0 %v919, 64
    %v2605 = vpop.permute.xlu0 %2604
    %2606 = vrot.lane.b32.xlu0 %v924, 64
    %v2607 = vpop.permute.xlu0 %2606
    %2608 = vrot.lane.b32.xlu0 %v927, 64
    %v2609 = vpop.permute.xlu0 %2608
    %2610 = vrot.lane.b32.xlu0 %v932, 64
    %v2611 = vpop.permute.xlu0 %2610
    %2612 = vrot.lane.b32.xlu0 %v935, 64
    %v2613 = vpop.permute.xlu0 %2612
    %2614 = vrot.lane.b32.xlu0 %v940, 64
    %v2615 = vpop.permute.xlu0 %2614
    %2616 = vrot.lane.b32.xlu0 %v943, 64
    %v2617 = vpop.permute.xlu0 %2616
    %2618 = vrot.lane.b32.xlu0 %v948, 64
    %v2619 = vpop.permute.xlu0 %2618
    %2620 = vrot.lane.b32.xlu0 %v951, 64
    %v2621 = vpop.permute.xlu0 %2620
    %2622 = vrot.lane.b32.xlu0 %v956, 64
    %v2623 = vpop.permute.xlu0 %2622
    %2624 = vrot.lane.b32.xlu0 %v959, 64
    %v2625 = vpop.permute.xlu0 %2624
    %2626 = vrot.lane.b32.xlu0 %v964, 64
    %v2627 = vpop.permute.xlu0 %2626
    %2628 = vrot.lane.b32.xlu0 %v967, 64
    %v2629 = vpop.permute.xlu0 %2628
    %2630 = vrot.lane.b32.xlu0 %v972, 64
    %v2631 = vpop.permute.xlu0 %2630
    %2632 = vrot.lane.b32.xlu0 %v975, 64
    %v2633 = vpop.permute.xlu0 %2632
    %2634 = vrot.lane.b32.xlu0 %v980, 64
    %v2635 = vpop.permute.xlu0 %2634
    %2636 = vrot.lane.b32.xlu0 %v983, 64
    %v2637 = vpop.permute.xlu0 %2636
    %v2670 = vsel %vm222, %v2510, %v2575
    %v2671 = vsel %vm222, %v2511, %v2577
    %v2672 = vsel %vm222, %v2512, %v2579
    %v2673 = vsel %vm222, %v2513, %v2581
    %v2674 = vsel %vm222, %v2514, %v2583
    %v2675 = vsel %vm222, %v2515, %v2585
    %v2676 = vsel %vm222, %v2516, %v2587
    %v2677 = vsel %vm222, %v2517, %v2589
    %v2678 = vsel %vm222, %v2518, %v2591
    %v2679 = vsel %vm222, %v2519, %v2593
    %v2680 = vsel %vm222, %v2520, %v2595
    %v2681 = vsel %vm222, %v2521, %v2597
    %v2682 = vsel %vm222, %v2522, %v2599
    %v2683 = vsel %vm222, %v2523, %v2601
    %v2684 = vsel %vm222, %v2524, %v2603
    %v2685 = vsel %vm222, %v2525, %v2605
    %v2686 = vsel %vm222, %v2526, %v2607
    %v2687 = vsel %vm222, %v2527, %v2609
    %v2688 = vsel %vm222, %v2528, %v2611
    %v2689 = vsel %vm222, %v2529, %v2613
    %v2690 = vsel %vm222, %v2530, %v2615
    %v2691 = vsel %vm222, %v2531, %v2617
    %v2692 = vsel %vm222, %v2532, %v2619
    %v2693 = vsel %vm222, %v2533, %v2621
    %v2694 = vsel %vm222, %v2534, %v2623
    %v2695 = vsel %vm222, %v2535, %v2625
    %v2696 = vsel %vm222, %v2536, %v2627
    %v2697 = vsel %vm222, %v2537, %v2629
    %v2698 = vsel %vm222, %v2538, %v2631
    %v2699 = vsel %vm222, %v2539, %v2633
    %v2700 = vsel %vm222, %v2540, %v2635
    %v2701 = vsel %vm222, %v2541, %v2637
    %vm2702 = vcmask 785408
    %v2703 = vsel %vm2702, %v2670, 0.0
    %v2704 = vsel %vm2702, %v2671, 0.0
    %v2705 = vsel %vm2702, %v2672, 0.0
    %v2706 = vsel %vm2702, %v2673, 0.0
    %v2707 = vsel %vm2702, %v2674, 0.0
    %v2708 = vsel %vm2702, %v2675, 0.0
    %v2709 = vsel %vm2702, %v2676, 0.0
    %v2710 = vsel %vm2702, %v2677, 0.0
    %v2711 = vsel %vm2702, %v2678, 0.0
    %v2712 = vsel %vm2702, %v2679, 0.0
    %v2713 = vsel %vm2702, %v2680, 0.0
    %v2714 = vsel %vm2702, %v2681, 0.0
    %v2715 = vsel %vm2702, %v2682, 0.0
    %v2716 = vsel %vm2702, %v2683, 0.0
    %v2717 = vsel %vm2702, %v2684, 0.0
    %v2718 = vsel %vm2702, %v2685, 0.0
    %v2719 = vsel %vm2702, %v2686, 0.0
    %v2720 = vsel %vm2702, %v2687, 0.0
    %v2721 = vsel %vm2702, %v2688, 0.0
    %v2722 = vsel %vm2702, %v2689, 0.0
    %v2723 = vsel %vm2702, %v2690, 0.0
    %v2724 = vsel %vm2702, %v2691, 0.0
    %v2725 = vsel %vm2702, %v2692, 0.0
    %v2726 = vsel %vm2702, %v2693, 0.0
    %v2727 = vsel %vm2702, %v2694, 0.0
    %v2728 = vsel %vm2702, %v2695, 0.0
    %v2729 = vsel %vm2702, %v2696, 0.0
    %v2730 = vsel %vm2702, %v2697, 0.0
    %v2731 = vsel %vm2702, %v2698, 0.0
    %v2732 = vsel %vm2702, %v2699, 0.0
    %v2733 = vsel %vm2702, %v2700, 0.0
    %v2734 = vsel %vm2702, %v2701, 0.0
    %2735 = vst [vmem:[#allocation2] sm:$0xff] %v2703
    %2736 = vst [vmem:[#allocation2 + $0x8] sm:$0xff] %v2704
    %2737 = vst [vmem:[#allocation2 + $0x10] sm:$0xff] %v2705
    %2738 = vst [vmem:[#allocation2 + $0x18] sm:$0xff] %v2706
    %2739 = vst [vmem:[#allocation2 + $0x20] sm:$0xff] %v2707
    %2740 = vst [vmem:[#allocation2 + $0x28] sm:$0xff] %v2708
    %2741 = vst [vmem:[#allocation2 + $0x30] sm:$0xff] %v2709
    %2742 = vst [vmem:[#allocation2 + $0x38] sm:$0xff] %v2710
    %2743 = vst [vmem:[#allocation2 + $0x40] sm:$0xff] %v2711
    %2744 = vst [vmem:[#allocation2 + $0x48] sm:$0xff] %v2712
    %2745 = vst [vmem:[#allocation2 + $0x50] sm:$0xff] %v2713
    %2746 = vst [vmem:[#allocation2 + $0x58] sm:$0xff] %v2714
    %2747 = vst [vmem:[#allocation2 + $0x60] sm:$0xff] %v2715
    %2748 = vst [vmem:[#allocation2 + $0x68] sm:$0xff] %v2716
    %2749 = vst [vmem:[#allocation2 + $0x70] sm:$0xff] %v2717
    %2750 = vst [vmem:[#allocation2 + $0x78] sm:$0xff] %v2718
    %2751 = vst [vmem:[#allocation2 + $0x80] sm:$0xff] %v2719
    %2752 = vst [vmem:[#allocation2 + $0x88] sm:$0xff] %v2720
    %2753 = vst [vmem:[#allocation2 + $0x90] sm:$0xff] %v2721
    %2754 = vst [vmem:[#allocation2 + $0x98] sm:$0xff] %v2722
    %2755 = vst [vmem:[#allocation2 + $0xa0] sm:$0xff] %v2723
    %2756 = vst [vmem:[#allocation2 + $0xa8] sm:$0xff] %v2724
    %2757 = vst [vmem:[#allocation2 + $0xb0] sm:$0xff] %v2725
    %2758 = vst [vmem:[#allocation2 + $0xb8] sm:$0xff] %v2726
    %2759 = vst [vmem:[#allocation2 + $0xc0] sm:$0xff] %v2727
    %2760 = vst [vmem:[#allocation2 + $0xc8] sm:$0xff] %v2728
    %2761 = vst [vmem:[#allocation2 + $0xd0] sm:$0xff] %v2729
    %2762 = vst [vmem:[#allocation2 + $0xd8] sm:$0xff] %v2730
    %2763 = vst [vmem:[#allocation2 + $0xe0] sm:$0xff] %v2731
    %2764 = vst [vmem:[#allocation2 + $0xe8] sm:$0xff] %v2732
    %2765 = vst [vmem:[#allocation2 + $0xf0] sm:$0xff] %v2733
    %2766 = vst [vmem:[#allocation2 + $0xf8] sm:$0xff] %v2734
    // Predicated region
    $region18: #{tpu_custom_call.1} parent=1 // pred_check
      _
    $region19: #{tpu_custom_call.1} parent=1 // pred_check_branch
      %2768 = sbr.rel (0) target = $region21
    $region20: #{tpu_custom_call.1} parent=1 // pred_region
      %s2770 = ssub.s32 4096, 4096
      %2771 = vsyncadd [#allocation3], %s2770
      %s2772 = sshll.u32 [#allocation2], 4
      %s2773 = int_to_ptr.vmem [resolvable:$true] %s2772
      %2778 = dma.vmem_to_hbm [thread:$0]  %s2773, 4096, %s4, [#allocation3], 128, 128, 8
    $region21: #{tpu_custom_call.1} parent=1 // pred_fallthru
      _
    // Predicated region
    $region22: #{tpu_custom_call.1} parent=1 // pred_check
      _
    $region23: #{tpu_custom_call.1} parent=1 // pred_check_branch
      %2780 = sbr.rel (0) target = $region25
    $region24: #{tpu_custom_call.1} parent=1 // pred_region
      %2781 = dma.done [#allocation3], 4096
    $region25: #{tpu_custom_call.1} parent=1 // pred_fallthru
      _
    %2782 = vsyncpa [#allocation3], 1

</llo_original>
